<compile_context>
chip_gen: v6e
topology: v6e:2x2x1
jax: 0.10.0
libtpu: 0.0.40
codegen_flags: <defaults>
</compile_context>

<pallas_src>
import math
import functools

import jax
import jax.numpy as jnp
from jax import lax
from jax.experimental import pallas as pl
from jax.experimental.pallas import tpu as pltpu


def _round_up(x, m):
    return ((x + m - 1) // m) * m


# ----------------------------- Pallas kernel --------------------------------

def _plif_kernel(x_ref, v_ref, z_ref, pt_ref, w_ref, par_ref, mask_ref,
                 vout_ref, zout_ref, ptout_ref, stack_ref,
                 *, ksize, pad, wp, n_pad, ch, cin, cpad, bt, compute_dtype):
    """One grid step processes `bt` padded-flat images.

    x_ref    : (bt, Cin, n_pad)       padded + flattened input (compute dtype)
    v_ref    : (bt, Ch,  n_pad) f32   previous membrane potential (kernel layout)
    z_ref    : (bt, Ch,  n_pad) bf16  previous spikes (kernel layout, halo/tail == 0)
    pt_ref   : (bt, Ch,  n_pad) f32   previous presynaptic trace
    w_ref    : (Ch+1, kk*Cpad)        fused per-tap weights [rec | ff | pool] (compute dtype)
    par_ref  : (Ch, 4) f32            [sig(leak_v), sig(leak_pt), sig(add_pt), clamp(thr)]
    mask_ref : (1, n_pad) f32         1 inside the original HxW image, 0 in halo / lane tail
    outputs  : new (v, z, pt) in the same padded-flat layout (z stored as bf16)
    stack_ref: (kk*Cpad, n_pad)       VMEM staging for the kk lane-shifted input copies
    """
    ctot = ch + cin + 1

    par = par_ref[...]
    leak_v = par[:, 0:1]
    leak_pt = par[:, 1:2]
    add_pt = par[:, 2:3]
    thresh = par[:, 3:4]
    mask = mask_ref[...]                                       # (1, n_pad)
    w = w_ref[...]                                             # (Ch+1, kk*Cpad)
    if cpad > ctot:
        pad_rows = jnp.zeros((cpad - ctot, n_pad), compute_dtype)

    for b in range(bt):
        x_c = x_ref[b]                                          # (Cin, n_pad) compute dtype
        z_lo = z_ref[b]                                         # (Ch, n_pad) bf16 (0/1)
        # per-pixel sum over input channels of |x| (feeds the avg-pool row)
        absx = jnp.sum(jnp.abs(x_c.astype(jnp.float32)), axis=0,
                       keepdims=True).astype(compute_dtype)     # (1, n_pad)

        parts = [z_lo.astype(compute_dtype), x_c, absx]
        if cpad > ctot:
            parts.append(pad_rows)
        xza = jnp.concatenate(parts, axis=0)                    # (Cpad, n_pad)

        # Stage the kk lane-shifted copies (conv as shifted matmul), 16-row aligned,
        # then ONE fused MXU contraction over K = kk*Cpad instead of kk tiny dots.
        t = 0
        for dy in range(ksize):
            for dx in range(ksize):
                s = (dy - pad) * wp + (dx - pad)
                shifted = xza if s == 0 else jnp.roll(xza, -s, axis=-1)
                stack_ref[pl.ds(t * cpad, cpad), :] = shifted
                t += 1

        acc = jnp.dot(w, stack_ref[...],
                      preferred_element_type=jnp.float32)       # (Ch+1, n_pad) f32
        conv = acc[0:ch]                                        # ff-conv + rec-conv
        pool = acc[ch:ch + 1]                                   # AvgPool(mean_c |x|)

        v = v_ref[b]
        pt = pt_ref[b]
        z = z_lo.astype(jnp.float32)

        pt_new = pt * leak_pt + (1.0 - leak_pt) * pool
        # hard_reset=True PLIF update
        v_new = v * leak_v * (1.0 - z) + (1.0 - leak_v) * (conv - add_pt * pt_new)
        # arctanspike forward == heaviside(v - thresh); act_width only shapes the
        # (unimplemented, backward-only) surrogate gradient.
        z_new = jnp.where(v_new > thresh, 1.0, 0.0)

        # Zero the halo / lane tail so the padded-flat state can be fed straight back
        # next step (keeps the recurrent conv's SAME zero-padding semantics).
        vout_ref[b] = v_new * mask
        ptout_ref[b] = pt_new * mask
        zout_ref[b] = (z_new * mask).astype(zout_ref.dtype)


# ------------------------------ JAX wrapper ----------------------------------

def conv_plif_recurrent_forward(x_nchw, prev_state, params, residual=0.0,
                                compute_dtype=jnp.bfloat16, batch_tile=1):
    """Forward pass of ConvPLIFRecurrent.

    Returns (z_out + residual, new_state) where new_state is kept in the padded-flat
    kernel layout (v_f32, z_bf16, pt_f32), each (B, Ch, n_pad); feed it back unchanged
    on the next timestep.  Use `state_to_dense` to recover (B, Ch, H, W) views.
    """
    w_ff, w_rec, leak_v_p, leak_pt_p, add_pt_p, thresh_p = params  # w_ff: (k,k,Cin,Ch)
    f32 = jnp.float32
    B, Cin, H, W = x_nchw.shape
    k = w_ff.shape[0]
    Ch = w_ff.shape[-1]
    p = k // 2
    Hp, Wp = H + 2 * p, W + 2 * p
    n_flat = Hp * Wp
    n_pad = _round_up(n_flat, 128)        # lane-dense: flat spatial axis multiple of 128
    kk = k * k
    Ctot = Ch + Cin + 1                   # [prev spikes | input | sum_c |x|]
    Cpad = _round_up(Ctot, 16)            # sublane-aligned per-tap block in the K stack

    # --- input: zero-pad spatially, flatten, pad flat axis to n_pad lanes ---
    xp = jnp.pad(x_nchw.astype(compute_dtype), ((0, 0), (0, 0), (p, p), (p, p)))
    x_f = jnp.pad(xp.reshape(B, Cin, n_flat), ((0, 0), (0, 0), (0, n_pad - n_flat)))

    # --- recurrent state stays in padded-flat kernel layout between timesteps ---
    if prev_state is None:
        v_f = jnp.zeros((B, Ch, n_pad), f32)
        z_f = jnp.zeros((B, Ch, n_pad), jnp.bfloat16)
        pt_f = jnp.zeros((B, Ch, n_pad), f32)
    else:
        v_f, z_f, pt_f = prev_state

    # --- fused per-tap weights: output rows [rec+ff conv | pool], one flat K axis ---
    wrec_t = jnp.transpose(w_rec.astype(f32), (0, 1, 3, 2)).reshape(kk, Ch, Ch)
    wff_t = jnp.transpose(w_ff.astype(f32), (0, 1, 3, 2)).reshape(kk, Ch, Cin)
    w_main = jnp.concatenate([wrec_t, wff_t, jnp.zeros((kk, Ch, 1), f32)], axis=-1)
    w_pool = jnp.zeros((kk, 1, Ctot), f32).at[:, 0, Ctot - 1].set(1.0 / (kk * Cin))
    w_comb = jnp.concatenate([w_main, w_pool], axis=1)               # (kk, Ch+1, Ctot)
    w_comb = jnp.pad(w_comb, ((0, 0), (0, 0), (0, Cpad - Ctot)))     # zero pad cols
    w_flat = jnp.transpose(w_comb, (1, 0, 2)).reshape(Ch + 1, kk * Cpad)
    w_flat = w_flat.astype(compute_dtype)

    # --- per-channel parameters, precomputed once ---
    par_tab = jnp.stack([
        jax.nn.sigmoid(leak_v_p.reshape(Ch).astype(f32)),
        jax.nn.sigmoid(leak_pt_p.reshape(Ch).astype(f32)),
        jax.nn.sigmoid(add_pt_p.reshape(Ch).astype(f32)),
        jnp.maximum(thresh_p.reshape(Ch).astype(f32), 0.01),
    ], axis=-1)                                                       # (Ch, 4)

    # --- interior mask: 1 inside the original HxW image, 0 in halo / lane tail ---
    idx = jnp.arange(n_pad)
    row, col = idx // Wp, idx % Wp
    interior = ((idx < n_flat) & (row >= p) & (row < Hp - p)
                & (col >= p) & (col < Wp - p))
    mask = interior.astype(f32).reshape(1, n_pad)

    bt = batch_tile if (batch_tile > 0 and B % batch_tile == 0) else 1
    grid = (B // bt,)

    kernel = functools.partial(
        _plif_kernel, ksize=k, pad=p, wp=Wp, n_pad=n_pad, ch=Ch, cin=Cin,
        cpad=Cpad, bt=bt, compute_dtype=compute_dtype)

    st_spec = pl.BlockSpec((bt, Ch, n_pad), lambda i: (i, 0, 0))

    nbytes = lambda a: a.size * a.dtype.itemsize
    cost = pl.CostEstimate(
        flops=2 * B * (Ch + 1) * kk * Cpad * n_pad,
        transcendentals=0,
        bytes_accessed=(nbytes(x_f) + 2 * (nbytes(v_f) + nbytes(z_f) + nbytes(pt_f))
                        + nbytes(w_flat) + nbytes(par_tab) + nbytes(mask)))

    v_out, z_out, pt_out = pl.pallas_call(
        kernel,
        out_shape=[jax.ShapeDtypeStruct((B, Ch, n_pad), f32),
                   jax.ShapeDtypeStruct((B, Ch, n_pad), jnp.bfloat16),
                   jax.ShapeDtypeStruct((B, Ch, n_pad), f32)],
        grid=grid,
        in_specs=[
            pl.BlockSpec((bt, Cin, n_pad), lambda i: (i, 0, 0)),   # x (compute dtype)
            st_spec,                                               # v  (f32)
            st_spec,                                               # z  (bf16)
            st_spec,                                               # pt (f32)
            pl.BlockSpec((Ch + 1, kk * Cpad), lambda i: (0, 0)),   # fused weights
            pl.BlockSpec((Ch, 4), lambda i: (0, 0)),               # packed params
            pl.BlockSpec((1, n_pad), lambda i: (0, 0)),            # interior mask
        ],
        out_specs=[st_spec, st_spec, st_spec],
        scratch_shapes=[pltpu.VMEM((kk * Cpad, n_pad), compute_dtype)],
        input_output_aliases={1: 0, 2: 1, 3: 2},    # in-place v / z / pt state update
        compiler_params=pltpu.CompilerParams(
            dimension_semantics=("parallel",)),
        cost_estimate=cost,
    )(x_f, v_f, z_f, pt_f, w_flat, par_tab, mask)

    # user-facing spike map: crop halo + lane tail, add residual in the input dtype
    z_img = z_out[:, :, :n_flat].reshape(B, Ch, Hp, Wp)[:, :, p:p + H, p:p + W]
    out = z_img.astype(x_nchw.dtype) + residual
    return out, (v_out, z_out, pt_out)


def state_to_dense(state, H, W, kernel_size):
    """Crop a kernel-layout state back to dense (B, Ch, H, W) f32 views."""
    p = kernel_size // 2
    Hp, Wp = H + 2 * p, W + 2 * p
    n_flat = Hp * Wp

    def crop(a):
        B, Ch = a.shape[0], a.shape[1]
        img = a[:, :, :n_flat].reshape(B, Ch, Hp, Wp)
        return img[:, :, p:p + H, p:p + W].astype(jnp.float32)

    v_f, z_f, pt_f = state
    return crop(v_f), crop(z_f), crop(pt_f)


# ----------------------- pure-JAX reference (for checking) -------------------

def _reference_forward(x_nchw, prev_state, params):
    w_ff, w_rec, leak_v_p, leak_pt_p, add_pt_p, thresh_p = params
    B, Cin, H, W = x_nchw.shape
    k = w_ff.shape[0]
    Ch = w_ff.shape[-1]
    dn = ("NCHW", "HWIO", "NCHW")
    ff = lax.conv_general_dilated(x_nchw, w_ff, (1, 1), "SAME", dimension_numbers=dn)
    if prev_state is None:
        prev_state = jnp.zeros((3, B, Ch, H, W), x_nchw.dtype)
    v, z, pt = prev_state
    rec = lax.conv_general_dilated(z, w_rec, (1, 1), "SAME", dimension_numbers=dn)
    thresh = jnp.maximum(thresh_p, 0.01).reshape(1, Ch, 1, 1)
    leak_v = jax.nn.sigmoid(leak_v_p).reshape(1, Ch, 1, 1)
    leak_pt = jax.nn.sigmoid(leak_pt_p).reshape(1, Ch, 1, 1)
    add_pt = jax.nn.sigmoid(add_pt_p).reshape(1, Ch, 1, 1)
    m = jnp.mean(jnp.abs(x_nchw), axis=1, keepdims=True)
    ones_k = jnp.full((k, k, 1, 1), 1.0 / (k * k), x_nchw.dtype)
    pooled = lax.conv_general_dilated(m, ones_k, (1, 1), "SAME", dimension_numbers=dn)
    pt_out = pt * leak_pt + (1 - leak_pt) * pooled
    v_out = v * leak_v * (1 - z) + (1 - leak_v) * (ff + rec - add_pt * pt_out)
    z_out = (v_out > thresh).astype(v_out.dtype)
    return z_out, jnp.stack([v_out, z_out, pt_out])


# ----------------------------- test helpers ----------------------------------

def _assert_close(name, a, b, atol=1e-4, rtol=1e-4):
    if not bool(jnp.allclose(a, b, rtol=rtol, atol=atol)):
        raise AssertionError(
            f"{name} mismatch: max abs diff = {float(jnp.max(jnp.abs(a - b)))}")


def _assert_spikes(name, z_k, z_r, v_r, thr, tol=1e-3):
    # spikes may only disagree where the membrane potential is within `tol` of the
    # threshold (unavoidable float accumulation-order differences at the heaviside).
    differs = jnp.abs(z_k - z_r) > 0.5
    borderline = jnp.abs(v_r - thr) < tol
    if not bool(jnp.all(jnp.logical_or(~differs, borderline))):
        raise AssertionError(f"{name}: spikes differ away from the threshold")


# --------------------------------- main ---------------------------------------

if __name__ == "__main__":
    B, Cin, Ch, H, W, k = 2, 4, 8, 16, 16, 3

    key = jax.random.PRNGKey(0)
    k0, k1, k2, k3, k4, k5, k6, k7 = jax.random.split(key, 8)

    w_scale_ff = math.sqrt(1.0 / Cin)
    w_scale_rec = math.sqrt(1.0 / Ch)
    w_ff = jax.random.uniform(k0, (k, k, Cin, Ch), jnp.float32, -w_scale_ff, w_scale_ff)
    w_rec = jax.random.uniform(k1, (k, k, Ch, Ch), jnp.float32, -w_scale_rec, w_scale_rec)
    leak_v = jax.random.normal(k2, (Ch,), jnp.float32) * 0.1 - 4.0
    leak_pt = jax.random.normal(k3, (Ch,), jnp.float32) * 0.1 - 4.0
    add_pt = jax.random.normal(k4, (Ch,), jnp.float32) * 0.1 - 2.0
    thresh = jax.random.normal(k5, (Ch,), jnp.float32) * 0.0 + 0.8
    params = (w_ff, w_rec, leak_v, leak_pt, add_pt, thresh)

    x1 = jax.random.normal(k6, (B, Cin, H, W), jnp.float32)
    x2 = jax.random.normal(k7, (B, Cin, H, W), jnp.float32)

    thr_b = jnp.maximum(thresh, 0.01).reshape(1, Ch, 1, 1)

    # ---------------- f32 parity path: strict check against the JAX reference ------
    out1, st1 = conv_plif_recurrent_forward(x1, None, params, compute_dtype=jnp.float32)
    jax.block_until_ready((out1, st1))
    ref_out1, ref_state1 = _reference_forward(x1, None, params)

    v1, z1, pt1 = state_to_dense(st1, H, W, k)
    _assert_close("v1", v1, ref_state1[0])
    _assert_close("pt1", pt1, ref_state1[2])
    _assert_spikes("z1", z1, ref_state1[1], ref_state1[0], thr_b)
    _assert_spikes("out1", out1, ref_out1, ref_state1[0], thr_b)

    # identical state for the reference (built BEFORE st1 is donated to step 2)
    dense_state1 = jnp.stack([v1, z1, pt1])

    out2, st2 = conv_plif_recurrent_forward(x2, st1, params, compute_dtype=jnp.float32)
    jax.block_until_ready((out2, st2))
    ref_out2, ref_state2 = _reference_forward(x2, dense_state1, params)

    v2_, z2_, pt2_ = state_to_dense(st2, H, W, k)
    _assert_close("v2", v2_, ref_state2[0])
    _assert_close("pt2", pt2_, ref_state2[2])
    _assert_spikes("z2", z2_, ref_state2[1], ref_state2[0], thr_b)
    _assert_spikes("out2", out2, ref_out2, ref_state2[0], thr_b)

    # ------------- default bf16 MXU path, 2 images per grid step (loose check) -----
    out_b, st_b = conv_plif_recurrent_forward(x1, None, params, batch_tile=2)
    jax.block_until_ready((out_b, st_b))
    vb, zb, ptb = state_to_dense(st_b, H, W, k)
    if not bool(jnp.all(jnp.isfinite(vb))):
        raise AssertionError("bf16 path: non-finite membrane potential")
    if not bool(jnp.all(jnp.logical_or(zb == 0.0, zb == 1.0))):
        raise AssertionError("bf16 path: spikes are not binary")
    if float(jnp.max(jnp.abs(vb - ref_state1[0]))) > 0.25:
        raise AssertionError("bf16 path: membrane potential deviates too much")

    print("KERNEL_OK")
</pallas_src>

<mosaic_0001>
module attributes {stable_mosaic.version = 11 : i64} {
  func.func @_plif_kernel(%arg0: i32, %arg1: memref<1x4x384xf32, #tpu.memory_space<vmem>>, %arg2: memref<1x8x384xf32, #tpu.memory_space<vmem>>, %arg3: memref<1x8x384xbf16, #tpu.memory_space<vmem>>, %arg4: memref<1x8x384xf32, #tpu.memory_space<vmem>>, %arg5: memref<9x144xf32, #tpu.memory_space<vmem>>, %arg6: memref<8x4xf32, #tpu.memory_space<vmem>>, %arg7: memref<1x384xf32, #tpu.memory_space<vmem>>, %arg8: memref<1x8x384xf32, #tpu.memory_space<vmem>>, %arg9: memref<1x8x384xbf16, #tpu.memory_space<vmem>>, %arg10: memref<1x8x384xf32, #tpu.memory_space<vmem>>, %arg11: memref<144x384xf32, #tpu.memory_space<vmem>>) attributes {dimension_semantics = [#tpu.dimension_semantics<parallel>], iteration_bounds = array<i64: 2>, scalar_prefetch = 0 : i64, scratch_operands = 1 : i64, tpu.core_type = #tpu.core_type<tc>, window_params = [{transform_indices = @transform_0, window_bounds = array<i64: 1, 4, 384>}, {transform_indices = @transform_1, window_bounds = array<i64: 1, 8, 384>}, {transform_indices = @transform_2, window_bounds = array<i64: 1, 8, 384>}, {transform_indices = @transform_3, window_bounds = array<i64: 1, 8, 384>}, {pipeline_mode = #tpu.pipeline_mode<synchronous>, transform_indices = @transform_4, window_bounds = array<i64: 9, 144>}, {pipeline_mode = #tpu.pipeline_mode<synchronous>, transform_indices = @transform_5, window_bounds = array<i64: 8, 4>}, {pipeline_mode = #tpu.pipeline_mode<synchronous>, transform_indices = @transform_6, window_bounds = array<i64: 1, 384>}, {transform_indices = @transform_7, window_bounds = array<i64: 1, 8, 384>}, {transform_indices = @transform_8, window_bounds = array<i64: 1, 8, 384>}, {transform_indices = @transform_9, window_bounds = array<i64: 1, 8, 384>}]} {
    %c0 = arith.constant 0 : index
    %c0_0 = arith.constant 0 : index
    %0 = vector.load %arg6[%c0, %c0_0] : memref<8x4xf32, #tpu.memory_space<vmem>>, vector<8x4xf32>
    %1 = vector.extract_strided_slice %0 {offsets = [0, 0], sizes = [8, 1], strides = [1, 1]} : vector<8x4xf32> to vector<8x1xf32>
    %2 = vector.extract_strided_slice %0 {offsets = [0, 1], sizes = [8, 1], strides = [1, 1]} : vector<8x4xf32> to vector<8x1xf32>
    %3 = vector.extract_strided_slice %0 {offsets = [0, 2], sizes = [8, 1], strides = [1, 1]} : vector<8x4xf32> to vector<8x1xf32>
    %4 = vector.extract_strided_slice %0 {offsets = [0, 3], sizes = [8, 1], strides = [1, 1]} : vector<8x4xf32> to vector<8x1xf32>
    %c0_1 = arith.constant 0 : index
    %c0_2 = arith.constant 0 : index
    %5 = vector.load %arg7[%c0_1, %c0_2] : memref<1x384xf32, #tpu.memory_space<vmem>>, vector<1x384xf32>
    %c0_3 = arith.constant 0 : index
    %c0_4 = arith.constant 0 : index
    %6 = vector.load %arg5[%c0_3, %c0_4] : memref<9x144xf32, #tpu.memory_space<vmem>>, vector<9x144xf32>
    %cst = arith.constant 0.000000e+00 : f32
    %7 = vector.broadcast %cst : f32 to vector<3x384xf32>
    %c0_5 = arith.constant 0 : index
    %c0_6 = arith.constant 0 : index
    %c0_7 = arith.constant 0 : index
    %8 = vector.load %arg1[%c0_5, %c0_6, %c0_7] : memref<1x4x384xf32, #tpu.memory_space<vmem>>, vector<1x4x384xf32>
    %9 = vector.shape_cast %8 : vector<1x4x384xf32> to vector<4x384xf32>
    %c0_8 = arith.constant 0 : index
    %c0_9 = arith.constant 0 : index
    %c0_10 = arith.constant 0 : index
    %10 = vector.load %arg3[%c0_8, %c0_9, %c0_10] : memref<1x8x384xbf16, #tpu.memory_space<vmem>>, vector<1x8x384xbf16>
    %11 = vector.shape_cast %10 : vector<1x8x384xbf16> to vector<8x384xbf16>
    %12 = math.absf %9 : vector<4x384xf32>
    %cst_11 = arith.constant dense<0.000000e+00> : vector<384xf32>
    %13 = vector.multi_reduction <add>, %12, %cst_11 [0] : vector<4x384xf32> to vector<384xf32>
    %14 = vector.shape_cast %13 : vector<384xf32> to vector<1x384xf32>
    %15 = arith.extf %11 : vector<8x384xbf16> to vector<8x384xf32>
    %16 = tpu.concatenate %15, %9, %14, %7 in 0 : vector<8x384xf32>, vector<4x384xf32>, vector<1x384xf32>, vector<3x384xf32> -> vector<16x384xf32>
    %17 = vector.extract_strided_slice %16 {offsets = [0, 365], sizes = [16, 19], strides = [1, 1]} : vector<16x384xf32> to vector<16x19xf32>
    %18 = vector.extract_strided_slice %16 {offsets = [0, 0], sizes = [16, 365], strides = [1, 1]} : vector<16x384xf32> to vector<16x365xf32>
    %19 = tpu.concatenate %17, %18 in 1 : vector<16x19xf32>, vector<16x365xf32> -> vector<16x384xf32>
    %c0_12 = arith.constant 0 : index
    %c0_13 = arith.constant 0 : index
    %20 = vector.load %arg11[%c0_12, %c0_13] : memref<144x384xf32, #tpu.memory_space<vmem>>, vector<16x384xf32>
    tpu.vector_store %arg11[%c0_12, %c0_13], %19 {strides = array<i32>} : memref<144x384xf32, #tpu.memory_space<vmem>>, vector<16x384xf32>,
    %21 = vector.extract_strided_slice %16 {offsets = [0, 366], sizes = [16, 18], strides = [1, 1]} : vector<16x384xf32> to vector<16x18xf32>
    %22 = vector.extract_strided_slice %16 {offsets = [0, 0], sizes = [16, 366], strides = [1, 1]} : vector<16x384xf32> to vector<16x366xf32>
    %23 = tpu.concatenate %21, %22 in 1 : vector<16x18xf32>, vector<16x366xf32> -> vector<16x384xf32>
    %c16 = arith.constant 16 : index
    %c0_14 = arith.constant 0 : index
    %24 = vector.load %arg11[%c16, %c0_14] : memref<144x384xf32, #tpu.memory_space<vmem>>, vector<16x384xf32>
    tpu.vector_store %arg11[%c16, %c0_14], %23 {strides = array<i32>} : memref<144x384xf32, #tpu.memory_space<vmem>>, vector<16x384xf32>,
    %25 = vector.extract_strided_slice %16 {offsets = [0, 367], sizes = [16, 17], strides = [1, 1]} : vector<16x384xf32> to vector<16x17xf32>
    %26 = vector.extract_strided_slice %16 {offsets = [0, 0], sizes = [16, 367], strides = [1, 1]} : vector<16x384xf32> to vector<16x367xf32>
    %27 = tpu.concatenate %25, %26 in 1 : vector<16x17xf32>, vector<16x367xf32> -> vector<16x384xf32>
    %c32 = arith.constant 32 : index
    %c0_15 = arith.constant 0 : index
    %28 = vector.load %arg11[%c32, %c0_15] : memref<144x384xf32, #tpu.memory_space<vmem>>, vector<16x384xf32>
    tpu.vector_store %arg11[%c32, %c0_15], %27 {strides = array<i32>} : memref<144x384xf32, #tpu.memory_space<vmem>>, vector<16x384xf32>,
    %29 = vector.extract_strided_slice %16 {offsets = [0, 383], sizes = [16, 1], strides = [1, 1]} : vector<16x384xf32> to vector<16x1xf32>
    %30 = vector.extract_strided_slice %16 {offsets = [0, 0], sizes = [16, 383], strides = [1, 1]} : vector<16x384xf32> to vector<16x383xf32>
    %31 = tpu.concatenate %29, %30 in 1 : vector<16x1xf32>, vector<16x383xf32> -> vector<16x384xf32>
    %c48 = arith.constant 48 : index
    %c0_16 = arith.constant 0 : index
    %32 = vector.load %arg11[%c48, %c0_16] : memref<144x384xf32, #tpu.memory_space<vmem>>, vector<16x384xf32>
    tpu.vector_store %arg11[%c48, %c0_16], %31 {strides = array<i32>} : memref<144x384xf32, #tpu.memory_space<vmem>>, vector<16x384xf32>,
    %c64 = arith.constant 64 : index
    %c0_17 = arith.constant 0 : index
    %33 = vector.load %arg11[%c64, %c0_17] : memref<144x384xf32, #tpu.memory_space<vmem>>, vector<16x384xf32>
    tpu.vector_store %arg11[%c64, %c0_17], %16 {strides = array<i32>} : memref<144x384xf32, #tpu.memory_space<vmem>>, vector<16x384xf32>,
    %34 = vector.extract_strided_slice %16 {offsets = [0, 1], sizes = [16, 383], strides = [1, 1]} : vector<16x384xf32> to vector<16x383xf32>
    %35 = vector.extract_strided_slice %16 {offsets = [0, 0], sizes = [16, 1], strides = [1, 1]} : vector<16x384xf32> to vector<16x1xf32>
    %36 = tpu.concatenate %34, %35 in 1 : vector<16x383xf32>, vector<16x1xf32> -> vector<16x384xf32>
    %c80 = arith.constant 80 : index
    %c0_18 = arith.constant 0 : index
    %37 = vector.load %arg11[%c80, %c0_18] : memref<144x384xf32, #tpu.memory_space<vmem>>, vector<16x384xf32>
    tpu.vector_store %arg11[%c80, %c0_18], %36 {strides = array<i32>} : memref<144x384xf32, #tpu.memory_space<vmem>>, vector<16x384xf32>,
    %38 = vector.extract_strided_slice %16 {offsets = [0, 17], sizes = [16, 367], strides = [1, 1]} : vector<16x384xf32> to vector<16x367xf32>
    %39 = vector.extract_strided_slice %16 {offsets = [0, 0], sizes = [16, 17], strides = [1, 1]} : vector<16x384xf32> to vector<16x17xf32>
    %40 = tpu.concatenate %38, %39 in 1 : vector<16x367xf32>, vector<16x17xf32> -> vector<16x384xf32>
    %c96 = arith.constant 96 : index
    %c0_19 = arith.constant 0 : index
    %41 = vector.load %arg11[%c96, %c0_19] : memref<144x384xf32, #tpu.memory_space<vmem>>, vector<16x384xf32>
    tpu.vector_store %arg11[%c96, %c0_19], %40 {strides = array<i32>} : memref<144x384xf32, #tpu.memory_space<vmem>>, vector<16x384xf32>,
    %42 = vector.extract_strided_slice %16 {offsets = [0, 18], sizes = [16, 366], strides = [1, 1]} : vector<16x384xf32> to vector<16x366xf32>
    %43 = vector.extract_strided_slice %16 {offsets = [0, 0], sizes = [16, 18], strides = [1, 1]} : vector<16x384xf32> to vector<16x18xf32>
    %44 = tpu.concatenate %42, %43 in 1 : vector<16x366xf32>, vector<16x18xf32> -> vector<16x384xf32>
    %c112 = arith.constant 112 : index
    %c0_20 = arith.constant 0 : index
    %45 = vector.load %arg11[%c112, %c0_20] : memref<144x384xf32, #tpu.memory_space<vmem>>, vector<16x384xf32>
    tpu.vector_store %arg11[%c112, %c0_20], %44 {strides = array<i32>} : memref<144x384xf32, #tpu.memory_space<vmem>>, vector<16x384xf32>,
    %46 = vector.extract_strided_slice %16 {offsets = [0, 19], sizes = [16, 365], strides = [1, 1]} : vector<16x384xf32> to vector<16x365xf32>
    %47 = vector.extract_strided_slice %16 {offsets = [0, 0], sizes = [16, 19], strides = [1, 1]} : vector<16x384xf32> to vector<16x19xf32>
    %48 = tpu.concatenate %46, %47 in 1 : vector<16x365xf32>, vector<16x19xf32> -> vector<16x384xf32>
    %c128 = arith.constant 128 : index
    %c0_21 = arith.constant 0 : index
    %49 = vector.load %arg11[%c128, %c0_21] : memref<144x384xf32, #tpu.memory_space<vmem>>, vector<16x384xf32>
    tpu.vector_store %arg11[%c128, %c0_21], %48 {strides = array<i32>} : memref<144x384xf32, #tpu.memory_space<vmem>>, vector<16x384xf32>,
    %c0_22 = arith.constant 0 : index
    %c0_23 = arith.constant 0 : index
    %50 = vector.load %arg11[%c0_22, %c0_23] : memref<144x384xf32, #tpu.memory_space<vmem>>, vector<144x384xf32>
    %cst_24 = arith.constant dense<0.000000e+00> : vector<9x384xf32>
    %51 = tpu.matmul %6, %50, %cst_24 {dimension_numbers = #tpu.dot_dimension_numbers<[1], [0], [0], [1], [0, 0, 1, 1], [], []>} : vector<9x144xf32>, vector<144x384xf32>, vector<9x384xf32> -> vector<9x384xf32>
    %52 = vector.extract_strided_slice %51 {offsets = [0, 0], sizes = [8, 384], strides = [1, 1]} : vector<9x384xf32> to vector<8x384xf32>
    %53 = vector.extract_strided_slice %51 {offsets = [8, 0], sizes = [1, 384], strides = [1, 1]} : vector<9x384xf32> to vector<1x384xf32>
    %c0_25 = arith.constant 0 : index
    %c0_26 = arith.constant 0 : index
    %c0_27 = arith.constant 0 : index
    %54 = vector.load %arg2[%c0_25, %c0_26, %c0_27] : memref<1x8x384xf32, #tpu.memory_space<vmem>>, vector<1x8x384xf32>
    %55 = vector.shape_cast %54 : vector<1x8x384xf32> to vector<8x384xf32>
    %c0_28 = arith.constant 0 : index
    %c0_29 = arith.constant 0 : index
    %c0_30 = arith.constant 0 : index
    %56 = vector.load %arg4[%c0_28, %c0_29, %c0_30] : memref<1x8x384xf32, #tpu.memory_space<vmem>>, vector<1x8x384xf32>
    %57 = vector.shape_cast %56 : vector<1x8x384xf32> to vector<8x384xf32>
    %58 = arith.extf %11 : vector<8x384xbf16> to vector<8x384xf32>
    %59 = vector.broadcast %2 : vector<8x1xf32> to vector<8x384xf32>
    %60 = arith.mulf %57, %59 : vector<8x384xf32>
    %cst_31 = arith.constant 1.000000e+00 : f32
    %61 = vector.broadcast %cst_31 : f32 to vector<8x1xf32>
    %62 = arith.subf %61, %2 : vector<8x1xf32>
    %63 = vector.broadcast %62 : vector<8x1xf32> to vector<8x384xf32>
    %64 = vector.broadcast %53 : vector<1x384xf32> to vector<8x384xf32>
    %65 = arith.mulf %63, %64 : vector<8x384xf32>
    %66 = arith.addf %60, %65 : vector<8x384xf32>
    %67 = vector.broadcast %1 : vector<8x1xf32> to vector<8x384xf32>
    %68 = arith.mulf %55, %67 : vector<8x384xf32>
    %cst_32 = arith.constant 1.000000e+00 : f32
    %69 = vector.broadcast %cst_32 : f32 to vector<8x384xf32>
    %70 = arith.subf %69, %58 : vector<8x384xf32>
    %71 = arith.mulf %68, %70 : vector<8x384xf32>
    %cst_33 = arith.constant 1.000000e+00 : f32
    %72 = vector.broadcast %cst_33 : f32 to vector<8x1xf32>
    %73 = arith.subf %72, %1 : vector<8x1xf32>
    %74 = vector.broadcast %3 : vector<8x1xf32> to vector<8x384xf32>
    %75 = arith.mulf %74, %66 : vector<8x384xf32>
    %76 = arith.subf %52, %75 : vector<8x384xf32>
    %77 = vector.broadcast %73 : vector<8x1xf32> to vector<8x384xf32>
    %78 = arith.mulf %77, %76 : vector<8x384xf32>
    %79 = arith.addf %71, %78 : vector<8x384xf32>
    %80 = vector.broadcast %4 : vector<8x1xf32> to vector<8x384xf32>
    %81 = arith.cmpf ogt, %79, %80 : vector<8x384xf32>
    %cst_34 = arith.constant 1.000000e+00 : f32
    %cst_35 = arith.constant 0.000000e+00 : f32
    %82 = vector.broadcast %cst_34 : f32 to vector<8x384xf32>
    %83 = vector.broadcast %cst_35 : f32 to vector<8x384xf32>
    %84 = arith.select %81, %82, %83 : vector<8x384xi1>, vector<8x384xf32>
    %85 = vector.broadcast %5 : vector<1x384xf32> to vector<8x384xf32>
    %86 = arith.mulf %79, %85 : vector<8x384xf32>
    %c0_36 = arith.constant 0 : index
    %c0_37 = arith.constant 0 : index
    %c0_38 = arith.constant 0 : index
    %87 = vector.load %arg8[%c0_36, %c0_37, %c0_38] : memref<1x8x384xf32, #tpu.memory_space<vmem>>, vector<1x8x384xf32>
    %88 = vector.shape_cast %87 : vector<1x8x384xf32> to vector<8x384xf32>
    %89 = vector.shape_cast %86 : vector<8x384xf32> to vector<1x8x384xf32>
    tpu.vector_store %arg8[%c0_36, %c0_37, %c0_38], %89 {strides = array<i32>} : memref<1x8x384xf32, #tpu.memory_space<vmem>>, vector<1x8x384xf32>,
    %90 = vector.broadcast %5 : vector<1x384xf32> to vector<8x384xf32>
    %91 = arith.mulf %66, %90 : vector<8x384xf32>
    %c0_39 = arith.constant 0 : index
    %c0_40 = arith.constant 0 : index
    %c0_41 = arith.constant 0 : index
    %92 = vector.load %arg10[%c0_39, %c0_40, %c0_41] : memref<1x8x384xf32, #tpu.memory_space<vmem>>, vector<1x8x384xf32>
    %93 = vector.shape_cast %92 : vector<1x8x384xf32> to vector<8x384xf32>
    %94 = vector.shape_cast %91 : vector<8x384xf32> to vector<1x8x384xf32>
    tpu.vector_store %arg10[%c0_39, %c0_40, %c0_41], %94 {strides = array<i32>} : memref<1x8x384xf32, #tpu.memory_space<vmem>>, vector<1x8x384xf32>,
    %95 = vector.broadcast %5 : vector<1x384xf32> to vector<8x384xf32>
    %96 = arith.mulf %84, %95 : vector<8x384xf32>
    %97 = arith.truncf %96 : vector<8x384xf32> to vector<8x384xbf16>
    %c0_42 = arith.constant 0 : index
    %c0_43 = arith.constant 0 : index
    %c0_44 = arith.constant 0 : index
    %98 = vector.load %arg9[%c0_42, %c0_43, %c0_44] : memref<1x8x384xbf16, #tpu.memory_space<vmem>>, vector<1x8x384xbf16>
    %99 = vector.shape_cast %98 : vector<1x8x384xbf16> to vector<8x384xbf16>
    %100 = vector.shape_cast %97 : vector<8x384xbf16> to vector<1x8x384xbf16>
    tpu.vector_store %arg9[%c0_42, %c0_43, %c0_44], %100 {strides = array<i32>} : memref<1x8x384xbf16, #tpu.memory_space<vmem>>, vector<1x8x384xbf16>,
    return
  }
  func.func @transform_0(%arg0: i32) -> (i32, i32, i32) {
    %c0_i32 = arith.constant 0 : i32
    %c0_i32_0 = arith.constant 0 : i32
    %c0_i32_1 = arith.constant 0 : i32
    return %arg0, %c0_i32, %c0_i32_0 : i32, i32, i32
  }
  func.func @transform_1(%arg0: i32) -> (i32, i32, i32) {
    %c0_i32 = arith.constant 0 : i32
    %c0_i32_0 = arith.constant 0 : i32
    %c0_i32_1 = arith.constant 0 : i32
    return %arg0, %c0_i32, %c0_i32_0 : i32, i32, i32
  }
  func.func @transform_2(%arg0: i32) -> (i32, i32, i32) {
    %c0_i32 = arith.constant 0 : i32
    %c0_i32_0 = arith.constant 0 : i32
    %c0_i32_1 = arith.constant 0 : i32
    return %arg0, %c0_i32, %c0_i32_0 : i32, i32, i32
  }
  func.func @transform_3(%arg0: i32) -> (i32, i32, i32) {
    %c0_i32 = arith.constant 0 : i32
    %c0_i32_0 = arith.constant 0 : i32
    %c0_i32_1 = arith.constant 0 : i32
    return %arg0, %c0_i32, %c0_i32_0 : i32, i32, i32
  }
  func.func @transform_4(%arg0: i32) -> (i32, i32) {
    %c0_i32 = arith.constant 0 : i32
    %c0_i32_0 = arith.constant 0 : i32
    %c0_i32_1 = arith.constant 0 : i32
    return %c0_i32, %c0_i32_0 : i32, i32
  }
  func.func @transform_5(%arg0: i32) -> (i32, i32) {
    %c0_i32 = arith.constant 0 : i32
    %c0_i32_0 = arith.constant 0 : i32
    %c0_i32_1 = arith.constant 0 : i32
    return %c0_i32, %c0_i32_0 : i32, i32
  }
  func.func @transform_6(%arg0: i32) -> (i32, i32) {
    %c0_i32 = arith.constant 0 : i32
    %c0_i32_0 = arith.constant 0 : i32
    %c0_i32_1 = arith.constant 0 : i32
    return %c0_i32, %c0_i32_0 : i32, i32
  }
  func.func @transform_7(%arg0: i32) -> (i32, i32, i32) {
    %c0_i32 = arith.constant 0 : i32
    %c0_i32_0 = arith.constant 0 : i32
    %c0_i32_1 = arith.constant 0 : i32
    return %arg0, %c0_i32, %c0_i32_0 : i32, i32, i32
  }
  func.func @transform_8(%arg0: i32) -> (i32, i32, i32) {
    %c0_i32 = arith.constant 0 : i32
    %c0_i32_0 = arith.constant 0 : i32
    %c0_i32_1 = arith.constant 0 : i32
    return %arg0, %c0_i32, %c0_i32_0 : i32, i32, i32
  }
  func.func @transform_9(%arg0: i32) -> (i32, i32, i32) {
    %c0_i32 = arith.constant 0 : i32
    %c0_i32_0 = arith.constant 0 : i32
    %c0_i32_1 = arith.constant 0 : i32
    return %arg0, %c0_i32, %c0_i32_0 : i32, i32, i32
  }
}

</mosaic_0001>

<llo_original>
// kernel: tpu_custom_call.1
$region0: #{tpu_custom_call.1}
  #allocation0 [shape = 'u32[]', space=smem, size = 0x4, offset = 0x4, fixed_abs, tag = 'smem constant byte address 0x4 - core index']
  #allocation1 [shape = 'u32[144,128]{1,0:T(1,128)}', space=vmem, size = 0x12000, scoped, tag = 'internal scratch']
  #allocation2 [shape = 'f32[144,384]{1,0:T(8,128)}', space=vmem, size = 0x36000, scoped, tag = 'scratch operand']
  %s0 = inlined_call_operand.vmem [shape: f32[2,4,384], index: 0, kind: input, shape index: {}]
  %s1 = inlined_call_operand.hbm [shape: f32[2,8,384], index: 1, kind: input, shape index: {}, may-alias: {1,7}]
  %s2 = inlined_call_operand.hbm [shape: bf16[2,8,384], index: 2, kind: input, shape index: {}, may-alias: {2,8}]
  %s3 = inlined_call_operand.hbm [shape: f32[2,8,384], index: 3, kind: input, shape index: {}, may-alias: {3,9}]
  %s4 = inlined_call_operand.vmem [shape: f32[9,144], index: 4, kind: input, shape index: {}]
  %s5 = inlined_call_operand.vmem [shape: f32[8,4], index: 5, kind: input, shape index: {}]
  %s6 = inlined_call_operand.vmem [shape: f32[1,384], index: 6, kind: input, shape index: {}]
  %s7 = inlined_call_operand.hbm [shape: f32[2,8,384], index: 7, kind: output, shape index: {0}, may-alias: {1,7}]
  %s8 = inlined_call_operand.hbm [shape: bf16[2,8,384], index: 8, kind: output, shape index: {1}, may-alias: {2,8}]
  %s9 = inlined_call_operand.hbm [shape: f32[2,8,384], index: 9, kind: output, shape index: {2}, may-alias: {3,9}]
  %10 = xla_tuple %s7, %s8, %s9
  %s11 = sld [smem:[#allocation0]]
  $region89: #{tpu_custom_call.1} parent=0
    _
  %s13 = ssub.s32 1, %s11
  %s14 = scalar_select 0, %s13, %s11
  $region1: #{tpu_custom_call.1} parent=0
    #allocation3 [shape = 'u8[24576]{0}', space=vmem, size = 0x6000, scoped, tag = 'input window, operand 1']
    #allocation4 [shape = 's32[2]{0}', space=sflag, size = 0x8, scoped, tag = 'scoped memory for tpu_custom_call.1']
    #allocation5 [shape = 's32[2]{0}', space=sflag, size = 0x8, scoped, tag = 'scoped memory for tpu_custom_call.1']
    #allocation6 [shape = 'u8[12288]{0}', space=vmem, size = 0x3000, scoped, tag = 'input window, operand 2']
    #allocation7 [shape = 's32[2]{0}', space=sflag, size = 0x8, scoped, tag = 'scoped memory for tpu_custom_call.1']
    #allocation8 [shape = 'u8[24576]{0}', space=vmem, size = 0x6000, scoped, tag = 'input window, operand 3']
    #allocation9 [shape = 'u8[24576]{0}', space=vmem, size = 0x6000, scoped, tag = 'output window, operand 0']
    #allocation10 [shape = 'u8[12288]{0}', space=vmem, size = 0x3000, scoped, tag = 'output window, operand 1']
    #allocation11 [shape = 's32[2]{0}', space=sflag, size = 0x8, scoped, tag = 'scoped memory for tpu_custom_call.1']
    #allocation12 [shape = 'u8[24576]{0}', space=vmem, size = 0x6000, scoped, tag = 'output window, operand 2']
    %15 = vsyncpa [#allocation4], 0
    %s16 = scalar_lea.sflag [#allocation4], 1
    %17 = vsyncpa %s16, 0
    %18 = vsyncpa [#allocation7], 0
    %s19 = scalar_lea.sflag [#allocation7], 1
    %20 = vsyncpa %s19, 0
    %21 = vsyncpa [#allocation5], 0
    %s22 = scalar_lea.sflag [#allocation5], 1
    %23 = vsyncpa %s22, 0
    %24 = vsyncpa [#allocation11], 0
    %s25 = scalar_lea.sflag [#allocation11], 1
    %26 = vsyncpa %s25, 0
    loop: start=0, step=1, limit=4
    $region2: #{tpu_custom_call.1} parent=1 // loop_pre_header
      _
    $region3: #{tpu_custom_call.1} parent=1 // loop_header
      %s28 = sphi 0, %s32
      %p29 = scmp.ge.s32.totalorder %s28, 4
      %s38 = sphi 0, %s40
      %s41 = sphi 0, %s38
      %s42 = sphi 0, %s41
      %s58 = sphi 0, %s42
      %s64 = sphi 0, %s66
      %s67 = sphi 0, %s64
      %s68 = sphi 0, %s67
      %s84 = sphi 0, %s68
      %s90 = sphi 0, %s92
      %s93 = sphi 0, %s90
      %s94 = sphi 0, %s93
      %s110 = sphi 0, %s94
      %s116 = sphi 0, %s118
      %s119 = sphi 0, %s116
      %s120 = sphi 0, %s119
      %s136 = sphi 0, %s120
      %s140 = sphi 0, %s140
      %s142 = sphi 0, %s140
      %s143 = sphi 0, %s142
      %s157 = sphi 0, %s143
      %s161 = sphi 0, %s161
      %s163 = sphi 0, %s161
      %s164 = sphi 0, %s163
      %s178 = sphi 0, %s164
      %s182 = sphi 0, %s182
      %s184 = sphi 0, %s182
      %s185 = sphi 0, %s184
      %s199 = sphi 0, %s185
      %s205 = sphi 0, %s207
      %s208 = sphi 0, %s205
      %s209 = sphi 0, %s208
      %s225 = sphi 0, %s209
      %s231 = sphi 0, %s233
      %s234 = sphi 0, %s231
      %s235 = sphi 0, %s234
      %s251 = sphi 0, %s235
      %s257 = sphi 0, %s259
      %s260 = sphi 0, %s257
      %s261 = sphi 0, %s260
      %s277 = sphi 0, %s261
    $region4: #{tpu_custom_call.1} parent=1 // loop_header_branch
      %31 = sbr.rel (%p29) target = $region8
    $region5: #{tpu_custom_call.1} parent=1 // loop_body
      %s33 = ssub.s32 %s28, 1
      %s34 = ssub.s32 %s28, 2
      %s35 = sadd.s32 %s28, 1
      %s36 = ssub.s32 %s28, %s35
      %p37 = scmp.eq.s32.totalorder %s36, 0
      %s39 = sadd.s32 %s38, 1
      %s40 = scalar_select %p37, %s38, %s39
      %p43 = pneg %p37
      %p44 = scmp.eq.s32.totalorder %s28, 1
      %p45 = por %p43, %p44
      %p46 = scmp.ne.s32.totalorder %s38, %s41
      %p47 = scmp.eq.s32.totalorder %s28, 0
      %p48 = por %p46, %p47
      %p49 = scmp.ne.s32.totalorder %s38, %s41
      %p50 = scmp.eq.s32.totalorder %s33, 1
      %p51 = por %p49, %p50
      %p52 = scmp.ne.s32.totalorder %s41, %s42
      %p53 = scmp.eq.s32.totalorder %s33, 0
      %p54 = por %p52, %p53
      %p55 = scmp.ne.s32.totalorder %s41, %s42
      %p56 = scmp.eq.s32.totalorder %s34, 1
      %p57 = por %p55, %p56
      %p59 = scmp.ne.s32.totalorder %s42, %s58
      %p60 = scmp.eq.s32.totalorder %s34, 0
      %p61 = por %p59, %p60
      %s62 = ssub.s32 %s28, %s35
      %p63 = scmp.eq.s32.totalorder %s62, 0
      %s65 = sadd.s32 %s64, 1
      %s66 = scalar_select %p63, %s64, %s65
      %p69 = pneg %p63
      %p70 = scmp.eq.s32.totalorder %s28, 1
      %p71 = por %p69, %p70
      %p72 = scmp.ne.s32.totalorder %s64, %s67
      %p73 = scmp.eq.s32.totalorder %s28, 0
      %p74 = por %p72, %p73
      %p75 = scmp.ne.s32.totalorder %s64, %s67
      %p76 = scmp.eq.s32.totalorder %s33, 1
      %p77 = por %p75, %p76
      %p78 = scmp.ne.s32.totalorder %s67, %s68
      %p79 = scmp.eq.s32.totalorder %s33, 0
      %p80 = por %p78, %p79
      %p81 = scmp.ne.s32.totalorder %s67, %s68
      %p82 = scmp.eq.s32.totalorder %s34, 1
      %p83 = por %p81, %p82
      %p85 = scmp.ne.s32.totalorder %s68, %s84
      %p86 = scmp.eq.s32.totalorder %s34, 0
      %p87 = por %p85, %p86
      %s88 = ssub.s32 %s28, %s35
      %p89 = scmp.eq.s32.totalorder %s88, 0
      %s91 = sadd.s32 %s90, 1
      %s92 = scalar_select %p89, %s90, %s91
      %p95 = pneg %p89
      %p96 = scmp.eq.s32.totalorder %s28, 1
      %p97 = por %p95, %p96
      %p98 = scmp.ne.s32.totalorder %s90, %s93
      %p99 = scmp.eq.s32.totalorder %s28, 0
      %p100 = por %p98, %p99
      %p101 = scmp.ne.s32.totalorder %s90, %s93
      %p102 = scmp.eq.s32.totalorder %s33, 1
      %p103 = por %p101, %p102
      %p104 = scmp.ne.s32.totalorder %s93, %s94
      %p105 = scmp.eq.s32.totalorder %s33, 0
      %p106 = por %p104, %p105
      %p107 = scmp.ne.s32.totalorder %s93, %s94
      %p108 = scmp.eq.s32.totalorder %s34, 1
      %p109 = por %p107, %p108
      %p111 = scmp.ne.s32.totalorder %s94, %s110
      %p112 = scmp.eq.s32.totalorder %s34, 0
      %p113 = por %p111, %p112
      %s114 = ssub.s32 %s28, %s35
      %p115 = scmp.eq.s32.totalorder %s114, 0
      %s117 = sadd.s32 %s116, 1
      %s118 = scalar_select %p115, %s116, %s117
      %p121 = pneg %p115
      %p122 = scmp.eq.s32.totalorder %s28, 1
      %p123 = por %p121, %p122
      %p124 = scmp.ne.s32.totalorder %s116, %s119
      %p125 = scmp.eq.s32.totalorder %s28, 0
      %p126 = por %p124, %p125
      %p127 = scmp.ne.s32.totalorder %s116, %s119
      %p128 = scmp.eq.s32.totalorder %s33, 1
      %p129 = por %p127, %p128
      %p130 = scmp.ne.s32.totalorder %s119, %s120
      %p131 = scmp.eq.s32.totalorder %s33, 0
      %p132 = por %p130, %p131
      %p133 = scmp.ne.s32.totalorder %s119, %s120
      %p134 = scmp.eq.s32.totalorder %s34, 1
      %p135 = por %p133, %p134
      %p137 = scmp.ne.s32.totalorder %s120, %s136
      %p138 = scmp.eq.s32.totalorder %s34, 0
      %p139 = por %p137, %p138
      %s141 = sadd.s32 %s140, 1
      %p144 = scmp.eq.s32.totalorder %s28, 1
      %p145 = scmp.ne.s32.totalorder %s140, %s142
      %p146 = scmp.eq.s32.totalorder %s28, 0
      %p147 = por %p145, %p146
      %p148 = scmp.ne.s32.totalorder %s140, %s142
      %p149 = scmp.eq.s32.totalorder %s33, 1
      %p150 = por %p148, %p149
      %p151 = scmp.ne.s32.totalorder %s142, %s143
      %p152 = scmp.eq.s32.totalorder %s33, 0
      %p153 = por %p151, %p152
      %p154 = scmp.ne.s32.totalorder %s142, %s143
      %p155 = scmp.eq.s32.totalorder %s34, 1
      %p156 = por %p154, %p155
      %p158 = scmp.ne.s32.totalorder %s143, %s157
      %p159 = scmp.eq.s32.totalorder %s34, 0
      %p160 = por %p158, %p159
      %s162 = sadd.s32 %s161, 1
      %p165 = scmp.eq.s32.totalorder %s28, 1
      %p166 = scmp.ne.s32.totalorder %s161, %s163
      %p167 = scmp.eq.s32.totalorder %s28, 0
      %p168 = por %p166, %p167
      %p169 = scmp.ne.s32.totalorder %s161, %s163
      %p170 = scmp.eq.s32.totalorder %s33, 1
      %p171 = por %p169, %p170
      %p172 = scmp.ne.s32.totalorder %s163, %s164
      %p173 = scmp.eq.s32.totalorder %s33, 0
      %p174 = por %p172, %p173
      %p175 = scmp.ne.s32.totalorder %s163, %s164
      %p176 = scmp.eq.s32.totalorder %s34, 1
      %p177 = por %p175, %p176
      %p179 = scmp.ne.s32.totalorder %s164, %s178
      %p180 = scmp.eq.s32.totalorder %s34, 0
      %p181 = por %p179, %p180
      %s183 = sadd.s32 %s182, 1
      %p186 = scmp.eq.s32.totalorder %s28, 1
      %p187 = scmp.ne.s32.totalorder %s182, %s184
      %p188 = scmp.eq.s32.totalorder %s28, 0
      %p189 = por %p187, %p188
      %p190 = scmp.ne.s32.totalorder %s182, %s184
      %p191 = scmp.eq.s32.totalorder %s33, 1
      %p192 = por %p190, %p191
      %p193 = scmp.ne.s32.totalorder %s184, %s185
      %p194 = scmp.eq.s32.totalorder %s33, 0
      %p195 = por %p193, %p194
      %p196 = scmp.ne.s32.totalorder %s184, %s185
      %p197 = scmp.eq.s32.totalorder %s34, 1
      %p198 = por %p196, %p197
      %p200 = scmp.ne.s32.totalorder %s185, %s199
      %p201 = scmp.eq.s32.totalorder %s34, 0
      %p202 = por %p200, %p201
      %s203 = ssub.s32 %s28, %s35
      %p204 = scmp.eq.s32.totalorder %s203, 0
      %s206 = sadd.s32 %s205, 1
      %s207 = scalar_select %p204, %s205, %s206
      %p210 = pneg %p204
      %p211 = scmp.eq.s32.totalorder %s28, 1
      %p212 = por %p210, %p211
      %p213 = scmp.ne.s32.totalorder %s205, %s208
      %p214 = scmp.eq.s32.totalorder %s28, 0
      %p215 = por %p213, %p214
      %p216 = scmp.ne.s32.totalorder %s205, %s208
      %p217 = scmp.eq.s32.totalorder %s33, 1
      %p218 = por %p216, %p217
      %p219 = scmp.ne.s32.totalorder %s208, %s209
      %p220 = scmp.eq.s32.totalorder %s33, 0
      %p221 = por %p219, %p220
      %p222 = scmp.ne.s32.totalorder %s208, %s209
      %p223 = scmp.eq.s32.totalorder %s34, 1
      %p224 = por %p222, %p223
      %p226 = scmp.ne.s32.totalorder %s209, %s225
      %p227 = scmp.eq.s32.totalorder %s34, 0
      %p228 = por %p226, %p227
      %s229 = ssub.s32 %s28, %s35
      %p230 = scmp.eq.s32.totalorder %s229, 0
      %s232 = sadd.s32 %s231, 1
      %s233 = scalar_select %p230, %s231, %s232
      %p236 = pneg %p230
      %p237 = scmp.eq.s32.totalorder %s28, 1
      %p238 = por %p236, %p237
      %p239 = scmp.ne.s32.totalorder %s231, %s234
      %p240 = scmp.eq.s32.totalorder %s28, 0
      %p241 = por %p239, %p240
      %p242 = scmp.ne.s32.totalorder %s231, %s234
      %p243 = scmp.eq.s32.totalorder %s33, 1
      %p244 = por %p242, %p243
      %p245 = scmp.ne.s32.totalorder %s234, %s235
      %p246 = scmp.eq.s32.totalorder %s33, 0
      %p247 = por %p245, %p246
      %p248 = scmp.ne.s32.totalorder %s234, %s235
      %p249 = scmp.eq.s32.totalorder %s34, 1
      %p250 = por %p248, %p249
      %p252 = scmp.ne.s32.totalorder %s235, %s251
      %p253 = scmp.eq.s32.totalorder %s34, 0
      %p254 = por %p252, %p253
      %s255 = ssub.s32 %s28, %s35
      %p256 = scmp.eq.s32.totalorder %s255, 0
      %s258 = sadd.s32 %s257, 1
      %s259 = scalar_select %p256, %s257, %s258
      %p262 = pneg %p256
      %p263 = scmp.eq.s32.totalorder %s28, 1
      %p264 = por %p262, %p263
      %p265 = scmp.ne.s32.totalorder %s257, %s260
      %p266 = scmp.eq.s32.totalorder %s28, 0
      %p267 = por %p265, %p266
      %p268 = scmp.ne.s32.totalorder %s257, %s260
      %p269 = scmp.eq.s32.totalorder %s33, 1
      %p270 = por %p268, %p269
      %p271 = scmp.ne.s32.totalorder %s260, %s261
      %p272 = scmp.eq.s32.totalorder %s33, 0
      %p273 = por %p271, %p272
      %p274 = scmp.ne.s32.totalorder %s260, %s261
      %p275 = scmp.eq.s32.totalorder %s34, 1
      %p276 = por %p274, %p275
      %p278 = scmp.ne.s32.totalorder %s261, %s277
      %p279 = scmp.eq.s32.totalorder %s34, 0
      %p280 = por %p278, %p279
      %p281 = scmp.le.s32.totalorder 1, %s28
      %p282 = scmp.lt.s32.totalorder %s28, 3
      %p283 = pnand %p281, %p282
      %p284 = pneg %p283
      // Predicated region
      $region9: #{tpu_custom_call.1} parent=5 // pred_check
        _
      $region10: #{tpu_custom_call.1} parent=5 // pred_check_branch
        %286 = sbr.rel (%p283) target = $region12
      $region11: #{tpu_custom_call.1} parent=5 // pred_region
        %s287 = ssub.s32 %s28, 1
        // Predicated region
        $region13: #{tpu_custom_call.1} parent=11 // pred_check
          %p288 = pneg %p153
        $region14: #{tpu_custom_call.1} parent=11 // pred_check_branch
          %290 = sbr.rel (%p288) target = $region16
        $region15: #{tpu_custom_call.1} parent=11 // pred_region
          _
        $region16: #{tpu_custom_call.1} parent=11 // pred_fallthru
          _
        // Predicated region
        $region17: #{tpu_custom_call.1} parent=11 // pred_check
          %p291 = pneg %p174
        $region18: #{tpu_custom_call.1} parent=11 // pred_check_branch
          %293 = sbr.rel (%p291) target = $region20
        $region19: #{tpu_custom_call.1} parent=11 // pred_region
          _
        $region20: #{tpu_custom_call.1} parent=11 // pred_fallthru
          _
        // Predicated region
        $region21: #{tpu_custom_call.1} parent=11 // pred_check
          %p294 = pneg %p195
        $region22: #{tpu_custom_call.1} parent=11 // pred_check_branch
          %296 = sbr.rel (%p294) target = $region24
        $region23: #{tpu_custom_call.1} parent=11 // pred_region
          _
        $region24: #{tpu_custom_call.1} parent=11 // pred_fallthru
          _
      $region12: #{tpu_custom_call.1} parent=5 // pred_fallthru
        _
      %p297 = scmp.lt.s32.totalorder %s28, 2
      // Predicated region
      $region25: #{tpu_custom_call.1} parent=5 // pred_check
        %p298 = pneg %p297
      $region26: #{tpu_custom_call.1} parent=5 // pred_check_branch
        %300 = sbr.rel (%p298) target = $region28
      $region27: #{tpu_custom_call.1} parent=5 // pred_region
        // Predicated region
        $region29: #{tpu_custom_call.1} parent=27 // pred_check
          %p301 = pneg %p48
        $region30: #{tpu_custom_call.1} parent=27 // pred_check_branch
          %303 = sbr.rel (%p301) target = $region32
        $region31: #{tpu_custom_call.1} parent=27 // pred_region
          %p304 = scmp.lt.s32.totalorder %s28, 1
          %s305 = scalar_select %p304, %s28, 1
          %s306 = smul.addr %s305, 3
          %s307 = smul.addr %s306, 4
          %s308 = scalar_lea.vmem %s0, %s307
        $region32: #{tpu_custom_call.1} parent=27 // pred_fallthru
          _
        // Predicated region
        $region33: #{tpu_custom_call.1} parent=27 // pred_check
          %p309 = pneg %p74
        $region34: #{tpu_custom_call.1} parent=27 // pred_check_branch
          %311 = sbr.rel (%p309) target = $region36
        $region35: #{tpu_custom_call.1} parent=27 // pred_region
          %s312 = sand.u32 %s64, 1
          %s313 = scalar_lea.sflag [#allocation4], %s312
          %s314 = sand.u32 %s64, 1
          %s315 = smul.addr %s314, 24
          %s316 = scalar_lea.vmem [#allocation3], %s315
          %s318 = ssub.s32 384, 384
          %319 = vsyncadd %s313, %s318
          %s320 = smul.addr %s28, 3
          %s321 = smul.addr %s320, 128
          %s322 = scalar_lea.hbm %s1, %s321
          %s324 = sshll.u32 %s316, 4
          %s325 = int_to_ptr.vmem [resolvable:$true] %s324
          %327 = dma.hbm_to_vmem [thread:$0]  %s322, 384, %s325, %s313
        $region36: #{tpu_custom_call.1} parent=27 // pred_fallthru
          _
        // Predicated region
        $region37: #{tpu_custom_call.1} parent=27 // pred_check
          %p328 = pneg %p100
        $region38: #{tpu_custom_call.1} parent=27 // pred_check_branch
          %330 = sbr.rel (%p328) target = $region40
        $region39: #{tpu_custom_call.1} parent=27 // pred_region
          %s331 = sand.u32 %s28, 1
          %s332 = scalar_lea.sflag [#allocation7], %s331
          %s333 = sand.u32 %s90, 1
          %s334 = smul.addr %s333, 12
          %s335 = scalar_lea.vmem [#allocation6], %s334
          %s337 = ssub.s32 192, 192
          %338 = vsyncadd %s332, %s337
          %s339 = smul.addr %s28, 3
          %s340 = smul.addr %s339, 64
          %s341 = scalar_lea.hbm %s2, %s340
          %s343 = sshll.u32 %s335, 4
          %s344 = int_to_ptr.vmem [resolvable:$true] %s343
          %346 = dma.hbm_to_vmem [thread:$0]  %s341, 192, %s344, %s332
        $region40: #{tpu_custom_call.1} parent=27 // pred_fallthru
          _
        // Predicated region
        $region41: #{tpu_custom_call.1} parent=27 // pred_check
          %p347 = pneg %p126
        $region42: #{tpu_custom_call.1} parent=27 // pred_check_branch
          %349 = sbr.rel (%p347) target = $region44
        $region43: #{tpu_custom_call.1} parent=27 // pred_region
          %s350 = sand.u32 %s28, 1
          %s351 = scalar_lea.sflag [#allocation7], %s350
          %s352 = sand.u32 %s116, 1
          %s353 = smul.addr %s352, 24
          %s354 = scalar_lea.vmem [#allocation8], %s353
          %s356 = ssub.s32 384, 384
          %357 = vsyncadd %s351, %s356
          %s358 = smul.addr %s28, 3
          %s359 = smul.addr %s358, 128
          %s360 = scalar_lea.hbm %s3, %s359
          %s362 = sshll.u32 %s354, 4
          %s363 = int_to_ptr.vmem [resolvable:$true] %s362
          %365 = dma.hbm_to_vmem [thread:$0]  %s360, 384, %s363, %s351
        $region44: #{tpu_custom_call.1} parent=27 // pred_fallthru
          _
      $region28: #{tpu_custom_call.1} parent=5 // pred_fallthru
        _
      %p366 = scmp.le.s32.totalorder 1, %s28
      %p367 = scmp.lt.s32.totalorder %s28, 3
      %p368 = pnand %p366, %p367
      %p369 = pneg %p368
      // Predicated region
      $region45: #{tpu_custom_call.1} parent=5 // pred_check
        _
      $region46: #{tpu_custom_call.1} parent=5 // pred_check_branch
        %371 = sbr.rel (%p368) target = $region48
      $region47: #{tpu_custom_call.1} parent=5 // pred_region
        %s372 = ssub.s32 %s28, 1
        %s373 = sand.u32 %s67, 1
        %s374 = scalar_lea.sflag [#allocation4], %s373
        %s375 = sand.u32 %s67, 1
        %s376 = smul.addr %s375, 24
        %s377 = scalar_lea.vmem [#allocation3], %s376
        // Predicated region
        $region49: #{tpu_custom_call.1} parent=47 // pred_check
          %p378 = pneg %p80
        $region50: #{tpu_custom_call.1} parent=47 // pred_check_branch
          %380 = sbr.rel (%p378) target = $region52
        $region51: #{tpu_custom_call.1} parent=47 // pred_region
          %381 = dma.done %s374, 384
        $region52: #{tpu_custom_call.1} parent=47 // pred_fallthru
          _
        %s382 = sand.u32 %s33, 1
        %s383 = scalar_lea.sflag [#allocation7], %s382
        %s384 = sand.u32 %s93, 1
        %s385 = smul.addr %s384, 12
        %s386 = scalar_lea.vmem [#allocation6], %s385
        // Predicated region
        $region53: #{tpu_custom_call.1} parent=47 // pred_check
          %p387 = pneg %p106
        $region54: #{tpu_custom_call.1} parent=47 // pred_check_branch
          %389 = sbr.rel (%p387) target = $region56
        $region55: #{tpu_custom_call.1} parent=47 // pred_region
          %390 = dma.done %s383, 192
        $region56: #{tpu_custom_call.1} parent=47 // pred_fallthru
          _
        %s391 = sand.u32 %s33, 1
        %s392 = scalar_lea.sflag [#allocation7], %s391
        %s393 = sand.u32 %s119, 1
        %s394 = smul.addr %s393, 24
        %s395 = scalar_lea.vmem [#allocation8], %s394
        // Predicated region
        $region57: #{tpu_custom_call.1} parent=47 // pred_check
          %p396 = pneg %p132
        $region58: #{tpu_custom_call.1} parent=47 // pred_check_branch
          %398 = sbr.rel (%p396) target = $region60
        $region59: #{tpu_custom_call.1} parent=47 // pred_region
          %399 = dma.done %s392, 384
        $region60: #{tpu_custom_call.1} parent=47 // pred_fallthru
          _
        %p400 = scmp.lt.s32.totalorder %s33, 1
        %s401 = scalar_select %p400, %s33, 1
        %s402 = smul.addr %s401, 3
        %s403 = smul.addr %s402, 4
        %s404 = scalar_lea.vmem %s0, %s403
        %p405 = pneg %p54
        %p406 = pneg %p51
        %s407 = sand.u32 %s67, 1
        %s408 = scalar_lea.sflag [#allocation4], %s407
        %s409 = sand.u32 %s67, 1
        %s410 = smul.addr %s409, 24
        %s411 = scalar_lea.vmem [#allocation3], %s410
        %p412 = pneg %p80
        %p413 = pneg %p77
        %s414 = sand.u32 %s33, 1
        %s415 = scalar_lea.sflag [#allocation7], %s414
        %s416 = sand.u32 %s93, 1
        %s417 = smul.addr %s416, 12
        %s418 = scalar_lea.vmem [#allocation6], %s417
        %p419 = pneg %p106
        %p420 = pneg %p103
        %s421 = sand.u32 %s33, 1
        %s422 = scalar_lea.sflag [#allocation7], %s421
        %s423 = sand.u32 %s119, 1
        %s424 = smul.addr %s423, 24
        %s425 = scalar_lea.vmem [#allocation8], %s424
        %p426 = pneg %p132
        %p427 = pneg %p129
        %p428 = pneg %p153
        %p429 = pneg %p150
        %p430 = pneg %p174
        %p431 = pneg %p171
        %p432 = pneg %p195
        %p433 = pneg %p192
        %p434 = pneg %p221
        %p435 = pneg %p218
        %s436 = sand.u32 %s208, 1
        %s437 = scalar_lea.sflag [#allocation5], %s436
        %s438 = sand.u32 %s208, 1
        %s439 = smul.addr %s438, 24
        %s440 = scalar_lea.vmem [#allocation9], %s439
        %p441 = pneg %p247
        %p442 = pneg %p244
        %s443 = sand.u32 %s33, 1
        %s444 = scalar_lea.sflag [#allocation11], %s443
        %s445 = sand.u32 %s234, 1
        %s446 = smul.addr %s445, 12
        %s447 = scalar_lea.vmem [#allocation10], %s446
        %p448 = pneg %p273
        %p449 = pneg %p270
        %s450 = sand.u32 %s33, 1
        %s451 = scalar_lea.sflag [#allocation11], %s450
        %s452 = sand.u32 %s260, 1
        %s453 = smul.addr %s452, 24
        %s454 = scalar_lea.vmem [#allocation12], %s453
        %p455 = scmp.lt.s32.totalorder %s33, 1
        %s456 = scalar_select %p455, %s33, 1
        %s457 = smul.addr %s456, 3
        %s458 = smul.addr %s457, 4
        %s459 = scalar_lea.vmem %s0, %s458
        %v460 = vld [vmem:[%s5] sm:$0xff]
        %v461 = vld [vmem:[%s6] sm:$0x7]
        %v462 = vld [vmem:[%s4] sm:$0xff]
        %v463 = vld [vmem:[%s4 + $0x8] sm:$0xff]
        %v464 = vld [vmem:[%s4 + $0x10] sm:$0x1]
        %v465 = vld [vmem:[%s4 + $0x18] sm:$0x1]
        %v466 = vld [vmem:[%s459] sm:$0xff]
        %v467 = vld [vmem:[%s459 + $0x8] sm:$0xf]
        %v468 = vld [vmem:[%s386] sm:$0xff]
        %v469 = vld [vmem:[%s386 + $0x8] sm:$0xf]
        %v470 = vand.u32 2147483647, %v466
        %v471 = vand.u32 2147483647, %v467
        %v473 = vcombine.high %v470, %v470
        %vm475 = vcmask 1043456
        %v476 = vsel %vm475, %v470, 0.0
        %v477 = vrot.slane %v476, 4
        %v478 = vadd.f32 %v476, %v477
        %v479 = vrot.slane %v478, 2
        %v480 = vadd.f32 %v478, %v479
        %v481 = vrot.slane %v480, 1
        %v482 = vadd.f32 %v480, %v481
        %v483 = vsel %vm475, %v473, 0.0
        %v484 = vrot.slane %v483, 4
        %v485 = vadd.f32 %v483, %v484
        %v486 = vrot.slane %v485, 2
        %v487 = vadd.f32 %v485, %v486
        %v488 = vrot.slane %v487, 1
        %v489 = vadd.f32 %v487, %v488
        %v490 = vsel %vm475, %v471, 0.0
        %v491 = vrot.slane %v490, 4
        %v492 = vadd.f32 %v490, %v491
        %v493 = vrot.slane %v492, 2
        %v494 = vadd.f32 %v492, %v493
        %v495 = vrot.slane %v494, 1
        %v496 = vadd.f32 %v494, %v495
        %v497 = vunpack.c.l.bf16 %v468
        %v498 = vunpack.c.h.bf16 %v468
        %v499 = vunpack.c.l.bf16 %v469
        %v501 = vcombine.high %v466, %v466
        %v503 = vsel %vm475, %v466, %v482
        %v504 = vsel %vm475, %v501, %v489
        %v505 = vsel %vm475, %v467, %v496
        %vm506 = vcmask 1044480
        %v507 = vsel %vm506, %v503, 0.0
        %v508 = vsel %vm506, %v504, 0.0
        %v509 = vsel %vm506, %v505, 0.0
        %512 = vrot.lane.b32.xlu0 %v499, 19
        %v513 = vpop.permute.xlu0 %512
        %514 = vrot.lane.b32.xlu0 %v509, 19
        %v515 = vpop.permute.xlu0 %514
        %522 = vrot.lane.b32.xlu0 %v497, 19
        %v523 = vpop.permute.xlu0 %522
        %524 = vrot.lane.b32.xlu0 %v498, 19
        %v525 = vpop.permute.xlu0 %524
        %526 = vrot.lane.b32.xlu0 %v507, 19
        %v527 = vpop.permute.xlu0 %526
        %528 = vrot.lane.b32.xlu0 %v508, 19
        %v529 = vpop.permute.xlu0 %528
        %vm530 = vcmask 154624
        %v531 = vsel %vm530, %v523, %v525
        %v532 = vsel %vm530, %v525, %v513
        %v533 = vsel %vm530, %v527, %v529
        %v534 = vsel %vm530, %v529, %v515
        %v541 = vsel %vm530, %v513, %v523
        %v542 = vsel %vm530, %v515, %v527
        %543 = vst [vmem:[#allocation2] sm:$0xff] %v541
        %544 = vst [vmem:[#allocation2 + $0x8] sm:$0xff] %v531
        %545 = vst [vmem:[#allocation2 + $0x10] sm:$0xff] %v532
        %546 = vst [vmem:[#allocation2 + $0x18] sm:$0xff] %v542
        %547 = vst [vmem:[#allocation2 + $0x20] sm:$0xff] %v533
        %548 = vst [vmem:[#allocation2 + $0x28] sm:$0xff] %v534
        %549 = vrot.lane.b32.xlu0 %v499, 18
        %v550 = vpop.permute.xlu0 %549
        %551 = vrot.lane.b32.xlu0 %v509, 18
        %v552 = vpop.permute.xlu0 %551
        %555 = vrot.lane.b32.xlu0 %v497, 18
        %v556 = vpop.permute.xlu0 %555
        %557 = vrot.lane.b32.xlu0 %v498, 18
        %v558 = vpop.permute.xlu0 %557
        %559 = vrot.lane.b32.xlu0 %v507, 18
        %v560 = vpop.permute.xlu0 %559
        %561 = vrot.lane.b32.xlu0 %v508, 18
        %v562 = vpop.permute.xlu0 %561
        %vm563 = vcmask 146432
        %v564 = vsel %vm563, %v556, %v558
        %v565 = vsel %vm563, %v558, %v550
        %v566 = vsel %vm563, %v560, %v562
        %v567 = vsel %vm563, %v562, %v552
        %v574 = vsel %vm563, %v550, %v556
        %v575 = vsel %vm563, %v552, %v560
        %576 = vst [vmem:[#allocation2 + $0x30] sm:$0xff] %v574
        %577 = vst [vmem:[#allocation2 + $0x38] sm:$0xff] %v564
        %578 = vst [vmem:[#allocation2 + $0x40] sm:$0xff] %v565
        %579 = vst [vmem:[#allocation2 + $0x48] sm:$0xff] %v575
        %580 = vst [vmem:[#allocation2 + $0x50] sm:$0xff] %v566
        %581 = vst [vmem:[#allocation2 + $0x58] sm:$0xff] %v567
        %582 = vrot.lane.b32.xlu0 %v499, 17
        %v583 = vpop.permute.xlu0 %582
        %584 = vrot.lane.b32.xlu0 %v509, 17
        %v585 = vpop.permute.xlu0 %584
        %588 = vrot.lane.b32.xlu0 %v497, 17
        %v589 = vpop.permute.xlu0 %588
        %590 = vrot.lane.b32.xlu0 %v498, 17
        %v591 = vpop.permute.xlu0 %590
        %592 = vrot.lane.b32.xlu0 %v507, 17
        %v593 = vpop.permute.xlu0 %592
        %594 = vrot.lane.b32.xlu0 %v508, 17
        %v595 = vpop.permute.xlu0 %594
        %vm596 = vcmask 138240
        %v597 = vsel %vm596, %v589, %v591
        %v598 = vsel %vm596, %v591, %v583
        %v599 = vsel %vm596, %v593, %v595
        %v600 = vsel %vm596, %v595, %v585
        %v607 = vsel %vm596, %v583, %v589
        %v608 = vsel %vm596, %v585, %v593
        %609 = vst [vmem:[#allocation2 + $0x60] sm:$0xff] %v607
        %610 = vst [vmem:[#allocation2 + $0x68] sm:$0xff] %v597
        %611 = vst [vmem:[#allocation2 + $0x70] sm:$0xff] %v598
        %612 = vst [vmem:[#allocation2 + $0x78] sm:$0xff] %v608
        %613 = vst [vmem:[#allocation2 + $0x80] sm:$0xff] %v599
        %614 = vst [vmem:[#allocation2 + $0x88] sm:$0xff] %v600
        %615 = vrot.lane.b32.xlu0 %v499, 1
        %v616 = vpop.permute.xlu0 %615
        %617 = vrot.lane.b32.xlu0 %v509, 1
        %v618 = vpop.permute.xlu0 %617
        %621 = vrot.lane.b32.xlu0 %v497, 1
        %v622 = vpop.permute.xlu0 %621
        %623 = vrot.lane.b32.xlu0 %v498, 1
        %v624 = vpop.permute.xlu0 %623
        %625 = vrot.lane.b32.xlu0 %v507, 1
        %v626 = vpop.permute.xlu0 %625
        %627 = vrot.lane.b32.xlu0 %v508, 1
        %v628 = vpop.permute.xlu0 %627
        %vm629 = vcmask 7168
        %v630 = vsel %vm629, %v622, %v624
        %v631 = vsel %vm629, %v624, %v616
        %v632 = vsel %vm629, %v626, %v628
        %v633 = vsel %vm629, %v628, %v618
        %v640 = vsel %vm629, %v616, %v622
        %v641 = vsel %vm629, %v618, %v626
        %642 = vst [vmem:[#allocation2 + $0x90] sm:$0xff] %v640
        %643 = vst [vmem:[#allocation2 + $0x98] sm:$0xff] %v630
        %644 = vst [vmem:[#allocation2 + $0xa0] sm:$0xff] %v631
        %645 = vst [vmem:[#allocation2 + $0xa8] sm:$0xff] %v641
        %646 = vst [vmem:[#allocation2 + $0xb0] sm:$0xff] %v632
        %647 = vst [vmem:[#allocation2 + $0xb8] sm:$0xff] %v633
        %648 = vst [vmem:[#allocation2 + $0xc0] sm:$0xff] %v497
        %649 = vst [vmem:[#allocation2 + $0xc8] sm:$0xff] %v498
        %650 = vst [vmem:[#allocation2 + $0xd0] sm:$0xff] %v499
        %651 = vst [vmem:[#allocation2 + $0xd8] sm:$0xff] %v507
        %652 = vst [vmem:[#allocation2 + $0xe0] sm:$0xff] %v508
        %653 = vst [vmem:[#allocation2 + $0xe8] sm:$0xff] %v509
        %654 = vrot.lane.b32.xlu0 %v497, 127
        %v655 = vpop.permute.xlu0 %654
        %656 = vrot.lane.b32.xlu0 %v498, 127
        %v657 = vpop.permute.xlu0 %656
        %658 = vrot.lane.b32.xlu0 %v499, 127
        %v659 = vpop.permute.xlu0 %658
        %660 = vrot.lane.b32.xlu0 %v507, 127
        %v661 = vpop.permute.xlu0 %660
        %662 = vrot.lane.b32.xlu0 %v508, 127
        %v663 = vpop.permute.xlu0 %662
        %664 = vrot.lane.b32.xlu0 %v509, 127
        %v665 = vpop.permute.xlu0 %664
        %vm666 = vcmask 1039360
        %v667 = vsel %vm666, %v655, %v657
        %v668 = vsel %vm666, %v657, %v659
        %v669 = vsel %vm666, %v661, %v663
        %v670 = vsel %vm666, %v663, %v665
        %v679 = vsel %vm666, %v659, %v655
        %v680 = vsel %vm666, %v665, %v661
        %681 = vst [vmem:[#allocation2 + $0xf0] sm:$0xff] %v667
        %682 = vst [vmem:[#allocation2 + $0xf8] sm:$0xff] %v668
        %683 = vst [vmem:[#allocation2 + $0x100] sm:$0xff] %v679
        %684 = vst [vmem:[#allocation2 + $0x108] sm:$0xff] %v669
        %685 = vst [vmem:[#allocation2 + $0x110] sm:$0xff] %v670
        %686 = vst [vmem:[#allocation2 + $0x118] sm:$0xff] %v680
        %687 = vrot.lane.b32.xlu0 %v497, 111
        %v688 = vpop.permute.xlu0 %687
        %689 = vrot.lane.b32.xlu0 %v498, 111
        %v690 = vpop.permute.xlu0 %689
        %691 = vrot.lane.b32.xlu0 %v499, 111
        %v692 = vpop.permute.xlu0 %691
        %693 = vrot.lane.b32.xlu0 %v507, 111
        %v694 = vpop.permute.xlu0 %693
        %695 = vrot.lane.b32.xlu0 %v508, 111
        %v696 = vpop.permute.xlu0 %695
        %697 = vrot.lane.b32.xlu0 %v509, 111
        %v698 = vpop.permute.xlu0 %697
        %vm699 = vcmask 908288
        %v700 = vsel %vm699, %v688, %v690
        %v701 = vsel %vm699, %v690, %v692
        %v702 = vsel %vm699, %v694, %v696
        %v703 = vsel %vm699, %v696, %v698
        %v712 = vsel %vm699, %v692, %v688
        %v713 = vsel %vm699, %v698, %v694
        %714 = vst [vmem:[#allocation2 + $0x120] sm:$0xff] %v700
        %715 = vst [vmem:[#allocation2 + $0x128] sm:$0xff] %v701
        %716 = vst [vmem:[#allocation2 + $0x130] sm:$0xff] %v712
        %717 = vst [vmem:[#allocation2 + $0x138] sm:$0xff] %v702
        %718 = vst [vmem:[#allocation2 + $0x140] sm:$0xff] %v703
        %719 = vst [vmem:[#allocation2 + $0x148] sm:$0xff] %v713
        %720 = vrot.lane.b32.xlu0 %v497, 110
        %v721 = vpop.permute.xlu0 %720
        %722 = vrot.lane.b32.xlu0 %v498, 110
        %v723 = vpop.permute.xlu0 %722
        %724 = vrot.lane.b32.xlu0 %v499, 110
        %v725 = vpop.permute.xlu0 %724
        %726 = vrot.lane.b32.xlu0 %v507, 110
        %v727 = vpop.permute.xlu0 %726
        %728 = vrot.lane.b32.xlu0 %v508, 110
        %v729 = vpop.permute.xlu0 %728
        %730 = vrot.lane.b32.xlu0 %v509, 110
        %v731 = vpop.permute.xlu0 %730
        %vm732 = vcmask 900096
        %v733 = vsel %vm732, %v721, %v723
        %v734 = vsel %vm732, %v723, %v725
        %v735 = vsel %vm732, %v727, %v729
        %v736 = vsel %vm732, %v729, %v731
        %v745 = vsel %vm732, %v725, %v721
        %v746 = vsel %vm732, %v731, %v727
        %747 = vst [vmem:[#allocation2 + $0x150] sm:$0xff] %v733
        %748 = vst [vmem:[#allocation2 + $0x158] sm:$0xff] %v734
        %749 = vst [vmem:[#allocation2 + $0x160] sm:$0xff] %v745
        %750 = vst [vmem:[#allocation2 + $0x168] sm:$0xff] %v735
        %751 = vst [vmem:[#allocation2 + $0x170] sm:$0xff] %v736
        %752 = vst [vmem:[#allocation2 + $0x178] sm:$0xff] %v746
        %753 = vrot.lane.b32.xlu0 %v497, 109
        %v754 = vpop.permute.xlu0 %753
        %755 = vrot.lane.b32.xlu0 %v498, 109
        %v756 = vpop.permute.xlu0 %755
        %757 = vrot.lane.b32.xlu0 %v499, 109
        %v758 = vpop.permute.xlu0 %757
        %759 = vrot.lane.b32.xlu0 %v507, 109
        %v760 = vpop.permute.xlu0 %759
        %761 = vrot.lane.b32.xlu0 %v508, 109
        %v762 = vpop.permute.xlu0 %761
        %763 = vrot.lane.b32.xlu0 %v509, 109
        %v764 = vpop.permute.xlu0 %763
        %vm765 = vcmask 891904
        %v766 = vsel %vm765, %v754, %v756
        %v767 = vsel %vm765, %v756, %v758
        %v768 = vsel %vm765, %v760, %v762
        %v769 = vsel %vm765, %v762, %v764
        %v778 = vsel %vm765, %v758, %v754
        %v779 = vsel %vm765, %v764, %v760
        %780 = vst [vmem:[#allocation2 + $0x180] sm:$0xff] %v766
        %781 = vst [vmem:[#allocation2 + $0x188] sm:$0xff] %v767
        %782 = vst [vmem:[#allocation2 + $0x190] sm:$0xff] %v778
        %783 = vst [vmem:[#allocation2 + $0x198] sm:$0xff] %v768
        %784 = vst [vmem:[#allocation2 + $0x1a0] sm:$0xff] %v769
        %785 = vst [vmem:[#allocation2 + $0x1a8] sm:$0xff] %v779
        %v786 = vld [vmem:[#allocation2] sm:$0xff]
        %v787 = vld [vmem:[#allocation2 + $0x8] sm:$0xff]
        %v788 = vld [vmem:[#allocation2 + $0x10] sm:$0xff]
        %v789 = vld [vmem:[#allocation2 + $0x18] sm:$0xff]
        %v790 = vld [vmem:[#allocation2 + $0x20] sm:$0xff]
        %v791 = vld [vmem:[#allocation2 + $0x28] sm:$0xff]
        %v792 = vld [vmem:[#allocation2 + $0x30] sm:$0xff]
        %v793 = vld [vmem:[#allocation2 + $0x38] sm:$0xff]
        %v794 = vld [vmem:[#allocation2 + $0x40] sm:$0xff]
        %v795 = vld [vmem:[#allocation2 + $0x48] sm:$0xff]
        %v796 = vld [vmem:[#allocation2 + $0x50] sm:$0xff]
        %v797 = vld [vmem:[#allocation2 + $0x58] sm:$0xff]
        %v798 = vld [vmem:[#allocation2 + $0x60] sm:$0xff]
        %v799 = vld [vmem:[#allocation2 + $0x68] sm:$0xff]
        %v800 = vld [vmem:[#allocation2 + $0x70] sm:$0xff]
        %v801 = vld [vmem:[#allocation2 + $0x78] sm:$0xff]
        %v802 = vld [vmem:[#allocation2 + $0x80] sm:$0xff]
        %v803 = vld [vmem:[#allocation2 + $0x88] sm:$0xff]
        %v804 = vld [vmem:[#allocation2 + $0x90] sm:$0xff]
        %v805 = vld [vmem:[#allocation2 + $0x98] sm:$0xff]
        %v806 = vld [vmem:[#allocation2 + $0xa0] sm:$0xff]
        %v807 = vld [vmem:[#allocation2 + $0xa8] sm:$0xff]
        %v808 = vld [vmem:[#allocation2 + $0xb0] sm:$0xff]
        %v809 = vld [vmem:[#allocation2 + $0xb8] sm:$0xff]
        %v810 = vld [vmem:[#allocation2 + $0xc0] sm:$0xff]
        %v811 = vld [vmem:[#allocation2 + $0xc8] sm:$0xff]
        %v812 = vld [vmem:[#allocation2 + $0xd0] sm:$0xff]
        %v813 = vld [vmem:[#allocation2 + $0xd8] sm:$0xff]
        %v814 = vld [vmem:[#allocation2 + $0xe0] sm:$0xff]
        %v815 = vld [vmem:[#allocation2 + $0xe8] sm:$0xff]
        %v816 = vld [vmem:[#allocation2 + $0xf0] sm:$0xff]
        %v817 = vld [vmem:[#allocation2 + $0xf8] sm:$0xff]
        %v818 = vld [vmem:[#allocation2 + $0x100] sm:$0xff]
        %v819 = vld [vmem:[#allocation2 + $0x108] sm:$0xff]
        %v820 = vld [vmem:[#allocation2 + $0x110] sm:$0xff]
        %v821 = vld [vmem:[#allocation2 + $0x118] sm:$0xff]
        %v822 = vld [vmem:[#allocation2 + $0x120] sm:$0xff]
        %v823 = vld [vmem:[#allocation2 + $0x128] sm:$0xff]
        %v824 = vld [vmem:[#allocation2 + $0x130] sm:$0xff]
        %v825 = vld [vmem:[#allocation2 + $0x138] sm:$0xff]
        %v826 = vld [vmem:[#allocation2 + $0x140] sm:$0xff]
        %v827 = vld [vmem:[#allocation2 + $0x148] sm:$0xff]
        %v828 = vld [vmem:[#allocation2 + $0x150] sm:$0xff]
        %v829 = vld [vmem:[#allocation2 + $0x158] sm:$0xff]
        %v830 = vld [vmem:[#allocation2 + $0x160] sm:$0xff]
        %v831 = vld [vmem:[#allocation2 + $0x168] sm:$0xff]
        %v832 = vld [vmem:[#allocation2 + $0x170] sm:$0xff]
        %v833 = vld [vmem:[#allocation2 + $0x178] sm:$0xff]
        %v834 = vld [vmem:[#allocation2 + $0x180] sm:$0xff]
        %v835 = vld [vmem:[#allocation2 + $0x188] sm:$0xff]
        %v836 = vld [vmem:[#allocation2 + $0x190] sm:$0xff]
        %v837 = vld [vmem:[#allocation2 + $0x198] sm:$0xff]
        %v838 = vld [vmem:[#allocation2 + $0x1a0] sm:$0xff]
        %v839 = vld [vmem:[#allocation2 + $0x1a8] sm:$0xff]
        %vm840 = vcmask 130048
        %v842 = vsel %vm840, %v463, 0
        %v845 = vsel %vm840, %v465, 0
        %847 = vmatprep.subr.mxu0 %v832
        %848 = vmatpush1.msra.mxu0 %v831
        %849 = vmatprep.subr.mxu0 %v829
        %850 = vmatpush1.msra.mxu0 %v828
        %851 = vmatprep.subr.mxu0 %v826
        %852 = vmatpush1.msra.mxu0 %v825
        %853 = vmatprep.subr.mxu0 %v823
        %854 = vmatpush1.msra.mxu0 %v822
        %855 = vmatprep.subr.mxu0 %v820
        %856 = vmatpush1.msra.mxu0 %v819
        %857 = vmatprep.subr.mxu0 %v817
        %858 = vmatpush1.msra.mxu0 %v816
        %859 = vmatprep.subr.mxu0 %v814
        %860 = vmatpush1.msra.mxu0 %v813
        %861 = vmatprep.subr.mxu0 %v811
        %862 = vmatpush1.msra.mxu0 %v810
        %863 = vmatprep.subr.mxu0 %v808
        %864 = vmatpush1.msra.mxu0 %v807
        %865 = vmatprep.subr.mxu0 %v805
        %866 = vmatpush1.msra.mxu0 %v804
        %867 = vmatprep.subr.mxu0 %v802
        %868 = vmatpush1.msra.mxu0 %v801
        %869 = vmatprep.subr.mxu0 %v799
        %870 = vmatpush1.msra.mxu0 %v798
        %871 = vmatprep.subr.mxu0 %v796
        %872 = vmatpush1.msra.mxu0 %v795
        %873 = vmatprep.subr.mxu0 %v793
        %874 = vmatpush1.msra.mxu0 %v792
        %875 = vmatprep.subr.mxu0 %v790
        %876 = vmatpush1.msra.mxu0 %v789
        %877 = vmatprep.subr.mxu0 %v787
        %878 = vmatpush1.msra.mxu0 %v786
        %879 = vmatprep.subr.mxu0 0.0
        %880 = vmatpush2.msra.mxu0 0.0
        %881 = vmatprep.subr.mxu0 0.0
        %882 = vmatpush2.msra.mxu0 0.0
        %883 = vmatprep.subr.mxu0 0.0
        %884 = vmatpush2.msra.mxu0 0.0
        %885 = vmatprep.subr.mxu0 0.0
        %886 = vmatpush2.msra.mxu0 0.0
        %887 = vmatprep.subr.mxu0 0.0
        %888 = vmatpush2.msra.mxu0 0.0
        %889 = vmatprep.subr.mxu0 0.0
        %890 = vmatpush2.msra.mxu0 0.0
        %891 = vmatprep.subr.mxu0 0.0
        %892 = vmatpush2.msra.mxu0 0.0
        %893 = vmatprep.subr.mxu0 0.0
        %894 = vmatpush2.msra.mxu0 0.0
        %895 = vmatprep.subr.mxu0 0.0
        %896 = vmatpush2.msra.mxu0 0.0
        %897 = vmatprep.subr.mxu0 0.0
        %898 = vmatpush2.msra.mxu0 0.0
        %899 = vmatprep.subr.mxu0 0.0
        %900 = vmatpush2.msra.mxu0 0.0
        %901 = vmatprep.subr.mxu0 0.0
        %902 = vmatpush2.msra.mxu0 0.0
        %903 = vmatprep.subr.mxu0 0.0
        %904 = vmatpush2.msra.mxu0 0.0
        %905 = vmatprep.subr.mxu0 0.0
        %906 = vmatpush2.msra.mxu0 0.0
        %907 = vmatprep.subr.mxu0 %v838
        %908 = vmatpush2.msra.mxu0 %v837
        %909 = vmatprep.subr.mxu0 %v835
        %910 = vmatpush2.msra.mxu0 %v834
        %911 = vmatprep.mubr.f32.mxu0 %v842
        %912 = vmatmul.mubr.f32.gmra.mxu0 %v462
        %v913 = vpop.f32.mrf.mxu0
        %v914 = vadd.f32 0.0, %v913
        %v915 = vpop.f32.mrf.mxu0
        %v916 = vadd.f32 0.0, %v915
        %917 = vmatprep.mubr.f32.mxu0 %v845
        %918 = vmatmul.mubr.f32.gmra.mxu0 %v464
        %v919 = vpop.f32.mrf.mxu0
        %v920 = vadd.f32 0.0, %v919
        %v921 = vpop.f32.mrf.mxu0
        %v922 = vadd.f32 0.0, %v921
        %923 = vdwg.mxu0
        %924 = vmatprep.subr.mxu0 0.0
        %925 = vmatpush1.msra.mxu0 %v833
        %926 = vmatprep.subr.mxu0 0.0
        %927 = vmatpush1.msra.mxu0 %v830
        %928 = vmatprep.subr.mxu0 0.0
        %929 = vmatpush1.msra.mxu0 %v827
        %930 = vmatprep.subr.mxu0 0.0
        %931 = vmatpush1.msra.mxu0 %v824
        %932 = vmatprep.subr.mxu0 0.0
        %933 = vmatpush1.msra.mxu0 %v821
        %934 = vmatprep.subr.mxu0 0.0
        %935 = vmatpush1.msra.mxu0 %v818
        %936 = vmatprep.subr.mxu0 0.0
        %937 = vmatpush1.msra.mxu0 %v815
        %938 = vmatprep.subr.mxu0 0.0
        %939 = vmatpush1.msra.mxu0 %v812
        %940 = vmatprep.subr.mxu0 0.0
        %941 = vmatpush1.msra.mxu0 %v809
        %942 = vmatprep.subr.mxu0 0.0
        %943 = vmatpush1.msra.mxu0 %v806
        %944 = vmatprep.subr.mxu0 0.0
        %945 = vmatpush1.msra.mxu0 %v803
        %946 = vmatprep.subr.mxu0 0.0
        %947 = vmatpush1.msra.mxu0 %v800
        %948 = vmatprep.subr.mxu0 0.0
        %949 = vmatpush1.msra.mxu0 %v797
        %950 = vmatprep.subr.mxu0 0.0
        %951 = vmatpush1.msra.mxu0 %v794
        %952 = vmatprep.subr.mxu0 0.0
        %953 = vmatpush1.msra.mxu0 %v791
        %954 = vmatprep.subr.mxu0 0.0
        %955 = vmatpush1.msra.mxu0 %v788
        %956 = vmatprep.subr.mxu0 0.0
        %957 = vmatpush2.msra.mxu0 0.0
        %958 = vmatprep.subr.mxu0 0.0
        %959 = vmatpush2.msra.mxu0 0.0
        %960 = vmatprep.subr.mxu0 0.0
        %961 = vmatpush2.msra.mxu0 0.0
        %962 = vmatprep.subr.mxu0 0.0
        %963 = vmatpush2.msra.mxu0 0.0
        %964 = vmatprep.subr.mxu0 0.0
        %965 = vmatpush2.msra.mxu0 0.0
        %966 = vmatprep.subr.mxu0 0.0
        %967 = vmatpush2.msra.mxu0 0.0
        %968 = vmatprep.subr.mxu0 0.0
        %969 = vmatpush2.msra.mxu0 0.0
        %970 = vmatprep.subr.mxu0 0.0
        %971 = vmatpush2.msra.mxu0 0.0
        %972 = vmatprep.subr.mxu0 0.0
        %973 = vmatpush2.msra.mxu0 0.0
        %974 = vmatprep.subr.mxu0 0.0
        %975 = vmatpush2.msra.mxu0 0.0
        %976 = vmatprep.subr.mxu0 0.0
        %977 = vmatpush2.msra.mxu0 0.0
        %978 = vmatprep.subr.mxu0 0.0
        %979 = vmatpush2.msra.mxu0 0.0
        %980 = vmatprep.subr.mxu0 0.0
        %981 = vmatpush2.msra.mxu0 0.0
        %982 = vmatprep.subr.mxu0 0.0
        %983 = vmatpush2.msra.mxu0 0.0
        %984 = vmatprep.subr.mxu0 0.0
        %985 = vmatpush2.msra.mxu0 %v839
        %986 = vmatprep.subr.mxu0 0.0
        %987 = vmatpush2.msra.mxu0 %v836
        %988 = vmatprep.mubr.f32.mxu0 %v842
        %989 = vmatmul.mubr.f32.gmra.mxu0 %v462
        %v990 = vpop.f32.mrf.mxu0
        %v991 = vadd.f32 0.0, %v990
        %v992 = vpop.f32.mrf.mxu0
        %993 = vmatprep.mubr.f32.mxu0 %v845
        %994 = vmatmul.mubr.f32.gmra.mxu0 %v464
        %v995 = vpop.f32.mrf.mxu0
        %v996 = vadd.f32 0.0, %v995
        %v997 = vpop.f32.mrf.mxu0
        %998 = vdwg.mxu0
        %v999 = vld [vmem:[%s377] sm:$0xff]
        %v1000 = vld [vmem:[%s377 + $0x8] sm:$0xff]
        %v1001 = vld [vmem:[%s377 + $0x10] sm:$0xff]
        %v1002 = vld [vmem:[%s395] sm:$0xff]
        %v1003 = vld [vmem:[%s395 + $0x8] sm:$0xff]
        %v1004 = vld [vmem:[%s395 + $0x10] sm:$0xff]
        %1006 = vset.pattern.permute.xlu0 1
        %1007 = vperm.xlu0 %1006, %v460
        %v1008 = vpop.permute.xlu0 %1007
        %v1010 = vmul.f32 %v1002, %v1008
        %v1011 = vmul.f32 %v1003, %v1008
        %v1012 = vmul.f32 %v1004, %v1008
        %v1013 = vsub.f32 1.0, %v460
        %1015 = vset.pattern.permute.xlu0 1
        %1016 = vperm.xlu0 %1015, %v1013
        %v1017 = vpop.permute.xlu0 %1016
        %v1019 = vlaneseq
        %v1020 = vshrl.u32 %v1019, 7
        %v1021 = vsub.s32 0, %v1020
        %v1022 = vrot.slane %v920, %v1021
        %v1023 = vlaneseq
        %v1024 = vshrl.u32 %v1023, 7
        %v1025 = vsub.s32 0, %v1024
        %v1026 = vrot.slane %v922, %v1025
        %v1027 = vlaneseq
        %v1028 = vshrl.u32 %v1027, 7
        %v1029 = vsub.s32 0, %v1028
        %v1030 = vrot.slane %v996, %v1029
        %v1031 = vmul.f32 %v1017, %v1022
        %v1032 = vmul.f32 %v1017, %v1026
        %v1033 = vmul.f32 %v1017, %v1030
        %v1034 = vadd.f32 %v1010, %v1031
        %v1035 = vadd.f32 %v1011, %v1032
        %v1036 = vadd.f32 %v1012, %v1033
        %1037 = vset.pattern.permute.xlu0 0
        %1038 = vperm.xlu0 %1037, %v460
        %v1039 = vpop.permute.xlu0 %1038
        %v1041 = vmul.f32 %v999, %v1039
        %v1042 = vmul.f32 %v1000, %v1039
        %v1043 = vmul.f32 %v1001, %v1039
        %v1044 = vsub.f32 1.0, %v497
        %v1045 = vsub.f32 1.0, %v498
        %v1046 = vsub.f32 1.0, %v499
        %v1047 = vmul.f32 %v1041, %v1044
        %v1048 = vmul.f32 %v1042, %v1045
        %v1049 = vmul.f32 %v1043, %v1046
        %1050 = vset.pattern.permute.xlu0 2
        %1051 = vperm.xlu0 %1050, %v460
        %v1052 = vpop.permute.xlu0 %1051
        %v1054 = vmul.f32 %v1052, %v1034
        %v1055 = vmul.f32 %v1052, %v1035
        %v1056 = vmul.f32 %v1052, %v1036
        %v1057 = vsub.f32 %v914, %v1054
        %v1058 = vsub.f32 %v916, %v1055
        %v1059 = vsub.f32 %v991, %v1056
        %1060 = vset.pattern.permute.xlu0 0
        %1061 = vperm.xlu0 %1060, %v1013
        %v1062 = vpop.permute.xlu0 %1061
        %v1064 = vmul.f32 %v1062, %v1057
        %v1065 = vmul.f32 %v1062, %v1058
        %v1066 = vmul.f32 %v1062, %v1059
        %v1067 = vadd.f32 %v1047, %v1064
        %v1068 = vadd.f32 %v1048, %v1065
        %v1069 = vadd.f32 %v1049, %v1066
        %1070 = vset.pattern.permute.xlu0 3
        %1071 = vperm.xlu0 %1070, %v460
        %v1072 = vpop.permute.xlu0 %1071
        %vm1074 = vcmp.gt.f32.partialorder %v1067, %v1072
        %vm1075 = vcmp.gt.f32.partialorder %v1068, %v1072
        %vm1076 = vcmp.gt.f32.partialorder %v1069, %v1072
        %v1077 = vsel %vm1074, 1.0, 0.0
        %v1078 = vsel %vm1075, 1.0, 0.0
        %v1079 = vsel %vm1076, 1.0, 0.0
        %v1081 = vlaneseq
        %v1082 = vshrl.u32 %v1081, 7
        %v1083 = vsub.s32 0, %v1082
        %v1084 = vrot.slane %v461, %v1083
        %v1085 = vlaneseq
        %v1086 = vshrl.u32 %v1085, 7
        %v1087 = vsub.s32 1, %v1086
        %v1088 = vrot.slane %v461, %v1087
        %v1089 = vlaneseq
        %v1090 = vshrl.u32 %v1089, 7
        %v1091 = vsub.s32 2, %v1090
        %v1092 = vrot.slane %v461, %v1091
        %v1096 = vmul.f32 %v1067, %v1084
        %v1097 = vmul.f32 %v1068, %v1088
        %v1098 = vmul.f32 %v1069, %v1092
        %1099 = vst [vmem:[%s440] sm:$0xff] %v1096
        %1100 = vst [vmem:[%s440 + $0x8] sm:$0xff] %v1097
        %1101 = vst [vmem:[%s440 + $0x10] sm:$0xff] %v1098
        %v1102 = vmul.f32 %v1034, %v1084
        %v1103 = vmul.f32 %v1035, %v1088
        %v1104 = vmul.f32 %v1036, %v1092
        %1105 = vst [vmem:[%s454] sm:$0xff] %v1102
        %1106 = vst [vmem:[%s454 + $0x8] sm:$0xff] %v1103
        %1107 = vst [vmem:[%s454 + $0x10] sm:$0xff] %v1104
        %v1108 = vmul.f32 %v1077, %v1084
        %v1109 = vmul.f32 %v1078, %v1088
        %v1110 = vmul.f32 %v1079, %v1092
        %v1111 = vpack.c.bf16 %v1108, %v1108
        %v1112 = vpack.c.bf16 %v1109, %v1109
        %v1113 = vpack.c.bf16 %v1110, %v1110
        %v1117 = vunpack.c.l.b16 %v1111
        %v1118 = vunpack.c.l.b16 %v1112
        %v1119 = vunpack.c.l.b16 %v1113
        %v1120 = vpack.c.b16 %v1118, %v1117
        %v1121 = vpack.c.b16 %v1119, %v1119
        %1124 = vst [vmem:[%s447] sm:$0xff] %v1120
        %1125 = vst [vmem:[%s447 + $0x8] sm:$0xf] %v1121
        %s1126 = sand.u32 %s208, 1
        %s1127 = scalar_lea.sflag [#allocation5], %s1126
        %s1128 = sand.u32 %s208, 1
        %s1129 = smul.addr %s1128, 24
        %s1130 = scalar_lea.vmem [#allocation9], %s1129
        %s1131 = sand.u32 %s33, 1
        %s1132 = scalar_lea.sflag [#allocation11], %s1131
        %s1133 = sand.u32 %s234, 1
        %s1134 = smul.addr %s1133, 12
        %s1135 = scalar_lea.vmem [#allocation10], %s1134
        %s1136 = sand.u32 %s33, 1
        %s1137 = scalar_lea.sflag [#allocation11], %s1136
        %s1138 = sand.u32 %s260, 1
        %s1139 = smul.addr %s1138, 24
        %s1140 = scalar_lea.vmem [#allocation12], %s1139
        // Predicated region
        $region61: #{tpu_custom_call.1} parent=47 // pred_check
          %p1141 = pneg %p218
        $region62: #{tpu_custom_call.1} parent=47 // pred_check_branch
          %1143 = sbr.rel (%p1141) target = $region64
        $region63: #{tpu_custom_call.1} parent=47 // pred_region
          %s1145 = ssub.s32 384, 384
          %1146 = vsyncadd %s1127, %s1145
          %s1147 = smul.addr %s33, 3
          %s1148 = smul.addr %s1147, 128
          %s1149 = scalar_lea.hbm %s7, %s1148
          %s1151 = sshll.u32 %s1130, 4
          %s1152 = int_to_ptr.vmem [resolvable:$true] %s1151
          %1154 = dma.vmem_to_hbm [thread:$0]  %s1152, 384, %s1149, %s1127
        $region64: #{tpu_custom_call.1} parent=47 // pred_fallthru
          _
        // Predicated region
        $region65: #{tpu_custom_call.1} parent=47 // pred_check
          %p1155 = pneg %p244
        $region66: #{tpu_custom_call.1} parent=47 // pred_check_branch
          %1157 = sbr.rel (%p1155) target = $region68
        $region67: #{tpu_custom_call.1} parent=47 // pred_region
          %s1159 = ssub.s32 192, 192
          %1160 = vsyncadd %s1132, %s1159
          %s1161 = smul.addr %s33, 3
          %s1162 = smul.addr %s1161, 64
          %s1163 = scalar_lea.hbm %s8, %s1162
          %s1165 = sshll.u32 %s1135, 4
          %s1166 = int_to_ptr.vmem [resolvable:$true] %s1165
          %1168 = dma.vmem_to_hbm [thread:$0]  %s1166, 192, %s1163, %s1132
        $region68: #{tpu_custom_call.1} parent=47 // pred_fallthru
          _
        // Predicated region
        $region69: #{tpu_custom_call.1} parent=47 // pred_check
          %p1169 = pneg %p270
        $region70: #{tpu_custom_call.1} parent=47 // pred_check_branch
          %1171 = sbr.rel (%p1169) target = $region72
        $region71: #{tpu_custom_call.1} parent=47 // pred_region
          %s1173 = ssub.s32 384, 384
          %1174 = vsyncadd %s1137, %s1173
          %s1175 = smul.addr %s33, 3
          %s1176 = smul.addr %s1175, 128
          %s1177 = scalar_lea.hbm %s9, %s1176
          %s1179 = sshll.u32 %s1140, 4
          %s1180 = int_to_ptr.vmem [resolvable:$true] %s1179
          %1182 = dma.vmem_to_hbm [thread:$0]  %s1180, 384, %s1177, %s1137
        $region72: #{tpu_custom_call.1} parent=47 // pred_fallthru
          _
      $region48: #{tpu_custom_call.1} parent=5 // pred_fallthru
        _
      %p1183 = scmp.le.s32.totalorder 2, %s28
      // Predicated region
      $region73: #{tpu_custom_call.1} parent=5 // pred_check
        %p1184 = pneg %p1183
      $region74: #{tpu_custom_call.1} parent=5 // pred_check_branch
        %1186 = sbr.rel (%p1184) target = $region76
      $region75: #{tpu_custom_call.1} parent=5 // pred_region
        %s1187 = ssub.s32 %s28, 2
        // Predicated region
        $region77: #{tpu_custom_call.1} parent=75 // pred_check
          %p1188 = pneg %p224
        $region78: #{tpu_custom_call.1} parent=75 // pred_check_branch
          %1190 = sbr.rel (%p1188) target = $region80
        $region79: #{tpu_custom_call.1} parent=75 // pred_region
          %s1191 = sand.u32 %s209, 1
          %s1192 = scalar_lea.sflag [#allocation5], %s1191
          %s1193 = sand.u32 %s209, 1
          %s1194 = smul.addr %s1193, 24
          %s1195 = scalar_lea.vmem [#allocation9], %s1194
          %1196 = dma.done %s1192, 384
        $region80: #{tpu_custom_call.1} parent=75 // pred_fallthru
          _
        // Predicated region
        $region81: #{tpu_custom_call.1} parent=75 // pred_check
          %p1197 = pneg %p250
        $region82: #{tpu_custom_call.1} parent=75 // pred_check_branch
          %1199 = sbr.rel (%p1197) target = $region84
        $region83: #{tpu_custom_call.1} parent=75 // pred_region
          %s1200 = sand.u32 %s34, 1
          %s1201 = scalar_lea.sflag [#allocation11], %s1200
          %s1202 = sand.u32 %s235, 1
          %s1203 = smul.addr %s1202, 12
          %s1204 = scalar_lea.vmem [#allocation10], %s1203
          %1205 = dma.done %s1201, 192
        $region84: #{tpu_custom_call.1} parent=75 // pred_fallthru
          _
        // Predicated region
        $region85: #{tpu_custom_call.1} parent=75 // pred_check
          %p1206 = pneg %p276
        $region86: #{tpu_custom_call.1} parent=75 // pred_check_branch
          %1208 = sbr.rel (%p1206) target = $region88
        $region87: #{tpu_custom_call.1} parent=75 // pred_region
          %s1209 = sand.u32 %s34, 1
          %s1210 = scalar_lea.sflag [#allocation11], %s1209
          %s1211 = sand.u32 %s261, 1
          %s1212 = smul.addr %s1211, 24
          %s1213 = scalar_lea.vmem [#allocation12], %s1212
          %1214 = dma.done %s1210, 384
        $region88: #{tpu_custom_call.1} parent=75 // pred_fallthru
          _
      $region76: #{tpu_custom_call.1} parent=5 // pred_fallthru
        _
    $region6: #{tpu_custom_call.1} parent=1 // loop_footer
      %s32 = sadd.s32 1, %s28
    $region7: #{tpu_custom_call.1} parent=1 // loop_footer_branch
      %27 = sbr.rel target = $region3
    $region8: #{tpu_custom_call.1} parent=1 // loop_exit
      _
    %1215 = vsyncpa [#allocation4], 1
    %s1216 = scalar_lea.sflag [#allocation4], 1
    %1217 = vsyncpa %s1216, 1
    %1218 = vsyncpa [#allocation7], 1
    %s1219 = scalar_lea.sflag [#allocation7], 1
    %1220 = vsyncpa %s1219, 1
    %1221 = vsyncpa [#allocation5], 1
    %s1222 = scalar_lea.sflag [#allocation5], 1
    %1223 = vsyncpa %s1222, 1
    %1224 = vsyncpa [#allocation11], 1
    %s1225 = scalar_lea.sflag [#allocation11], 1
    %1226 = vsyncpa %s1225, 1

</llo_original>
